<compile_context>
chip_gen: v7x
topology: tpu7x:2x2x1
jax: 0.10.0
libtpu: 0.0.40
codegen_flags: <defaults>
</compile_context>

<pallas_src>
import functools

import jax
import jax.numpy as jnp
from jax.experimental import pallas as pl
from jax.experimental.pallas import tpu as pltpu

LEAKY_SLOPE = 0.01  # nn.LeakyReLU() default negative_slope


def _leaky_relu(x):
    return jnp.where(x >= 0, x, LEAKY_SLOPE * x)


def _round_up(x, m):
    return ((x + m - 1) // m) * m


def _pad2(x, rows, cols):
    pr, pc = rows - x.shape[0], cols - x.shape[1]
    if pr == 0 and pc == 0:
        return x
    return jnp.pad(x, ((0, pr), (0, pc)))


def _spec(shape, index_map, depth):
    # Optional >2-deep multi-buffering; cheap once K-blocking shrinks chunks.
    # (Sweep depth=2 vs 3 per target; default 2 = standard double-buffering.)
    if depth > 2 and hasattr(pl, "Buffered"):
        try:
            return pl.BlockSpec(shape, index_map, pipeline_mode=pl.Buffered(depth))
        except TypeError:
            pass
    return pl.BlockSpec(shape, index_map)


def bi_aggregator_kernel(bid_ref, cnt_ref, norm_ref, ego_k_ref, ego_m_ref,
                         w1_ref, b1_ref, w2_ref, b2_ref, out_ref, acc_ref):
    # bid_ref: (nb_r*nb_k,) SMEM compacted nonzero-chunk ids (used by index_maps)
    # cnt_ref: (nb_r,)      SMEM number of nonzero chunks per row block
    # norm_ref:  (tm, kn)   adjacency block           (matmul_dtype)
    # ego_k_ref: (kn, Dp)   ego chunk for the spmm    (matmul_dtype)
    # ego_m_ref: (tm, Dp)   ego row tile              (original dtype)
    # w1/w2: (Dp, Dop), b1/b2: (1, Dop), out_ref: (tm, Dop)
    # acc_ref:   (tm, Dp)   f32 running `side` accumulator (VMEM scratch)
    del bid_ref  # consumed only by the index_maps
    i = pl.program_id(0)
    k = pl.program_id(1)

    @pl.when(k == 0)
    def _init():
        acc_ref[...] = jnp.zeros_like(acc_ref)

    # Skip MXU work for chunks beyond this row block's nonzero count; padded
    # entries repeat the previous block index, so they cost no DMA either.
    @pl.when(k < cnt_ref[i])
    def _accumulate():
        acc_ref[...] += jnp.dot(norm_ref[...], ego_k_ref[...],
                                preferred_element_type=jnp.float32)

    @pl.when(k == pl.num_programs(1) - 1)
    def _finalize():
        side = acc_ref[...]
        ego = ego_m_ref[...].astype(jnp.float32)
        sum_out = _leaky_relu(
            jnp.dot(ego + side, w1_ref[...],
                    preferred_element_type=jnp.float32) + b1_ref[...])
        bi_out = _leaky_relu(
            jnp.dot(ego * side, w2_ref[...],
                    preferred_element_type=jnp.float32) + b2_ref[...])
        # TODO(synk): message_dropout with p>0 would need pltpu.prng_* masking
        # here; with dropout=0.0 it is the identity, matching the module.
        out_ref[...] = (bi_out + sum_out).astype(out_ref.dtype)


@functools.partial(jax.jit,
                   static_argnames=("tm", "kn", "matmul_dtype", "buffer_depth"))
def bi_aggregator(norm_dense, ego, w1, b1, w2, b2, *,
                  tm=256, kn=512, matmul_dtype=jnp.bfloat16, buffer_depth=2):
    """bi-aggregator forward. tm=256 for v6e/v7x MXU width, use tm=128 on v5e."""
    N, D = ego.shape
    Dout = w1.shape[1]

    # ---- tile geometry (pad instead of asserting divisibility) -------------
    tm = max(8, _round_up(tm, 8))
    kn = max(128, _round_up(min(kn, N), 128))
    Mp = _round_up(N, tm)        # padded row count (adjacency rows / output)
    Kp = _round_up(N, kn)        # padded col count (adjacency cols / ego rows)
    Dp = _round_up(D, 128)       # lane-dense input dim
    Dop = _round_up(Dout, 128)   # lane-dense output dim (unmasked stores)
    nb_r, nb_k = Mp // tm, Kp // kn

    # ---- pad operands (zeros cannot contaminate `side`) ---------------------
    norm_f = _pad2(norm_dense, Mp, Kp)
    ego_k = _pad2(ego, Kp, Dp).astype(matmul_dtype)   # spmm RHS chunks
    ego_m = _pad2(ego, Mp, Dp)                        # row tiles (orig dtype)
    w1p, b1p = _pad2(w1, Dp, Dop), _pad2(b1, 1, Dop)
    w2p, b2p = _pad2(w2, Dp, Dop), _pad2(b2, 1, Dop)

    # ---- block-sparsity structure (wrapper-side preprocessing) --------------
    # In a real pipeline this comes straight from the sparse format instead of
    # being recovered from a densified matrix.
    blk_nnz = (norm_f.reshape(nb_r, tm, nb_k, kn) != 0).any(axis=(1, 3))
    counts = blk_nnz.sum(axis=1).astype(jnp.int32)                 # (nb_r,)
    col = jnp.arange(nb_k, dtype=jnp.int32)
    keys = jnp.where(blk_nnz, col[None, :], col[None, :] + nb_k)
    ids = (jnp.sort(keys, axis=1) % nb_k).astype(jnp.int32)        # nnz first
    last_valid = jnp.take_along_axis(ids, jnp.maximum(counts - 1, 0)[:, None],
                                     axis=1)
    pos = jnp.arange(nb_k, dtype=jnp.int32)[None, :]
    block_ids = jnp.where(pos < counts[:, None], ids, last_valid)
    block_ids = block_ids.reshape(-1).astype(jnp.int32)            # flat SMEM

    norm_p = norm_f.astype(matmul_dtype)

    # ---- explicit VMEM budget (stays constant in N thanks to K-blocking) ----
    itm = jnp.dtype(matmul_dtype).itemsize
    ite = jnp.dtype(ego.dtype).itemsize
    itw = jnp.dtype(w1.dtype).itemsize
    depth = max(2, buffer_depth)
    vmem_need = (depth * tm * kn * itm        # adjacency chunk buffers
                 + depth * kn * Dp * itm      # ego spmm-chunk buffers
                 + 2 * tm * Dp * ite          # ego row tile
                 + 2 * 2 * Dp * Dop * itw     # W1, W2
                 + 2 * 2 * 8 * Dop * itw      # biases (sublane-padded)
                 + 2 * tm * Dop * ite         # output tile
                 + tm * Dp * 4)               # f32 accumulator scratch
    vmem_limit = int(min(64 * 1024 * 1024,
                         max(32 * 1024 * 1024, 2 * vmem_need)))

    grid_spec = pltpu.PrefetchScalarGridSpec(
        num_scalar_prefetch=2,
        grid=(nb_r, nb_k),
        in_specs=[
            # adjacency block: data-dependent column-chunk index
            _spec((tm, kn),
                  lambda i, k, bid, cnt: (i, bid[i * nb_k + k]), buffer_depth),
            # ego chunk for the spmm (same data-dependent chunk index)
            _spec((kn, Dp),
                  lambda i, k, bid, cnt: (bid[i * nb_k + k], 0), buffer_depth),
            # ego row tile: invariant along k -> DMA'd once per row block
            pl.BlockSpec((tm, Dp), lambda i, k, bid, cnt: (i, 0)),
            pl.BlockSpec((Dp, Dop), lambda i, k, bid, cnt: (0, 0)),   # W1
            pl.BlockSpec((1, Dop), lambda i, k, bid, cnt: (0, 0)),    # b1
            pl.BlockSpec((Dp, Dop), lambda i, k, bid, cnt: (0, 0)),   # W2
            pl.BlockSpec((1, Dop), lambda i, k, bid, cnt: (0, 0)),    # b2
        ],
        out_specs=pl.BlockSpec((tm, Dop), lambda i, k, bid, cnt: (i, 0)),
        scratch_shapes=[pltpu.VMEM((tm, Dp), jnp.float32)],
    )

    out = pl.pallas_call(
        bi_aggregator_kernel,
        out_shape=jax.ShapeDtypeStruct((Mp, Dop), ego.dtype),
        grid_spec=grid_spec,
        compiler_params=pltpu.CompilerParams(
            dimension_semantics=("parallel", "arbitrary"),
            vmem_limit_bytes=vmem_limit),
    )(block_ids, counts, norm_p, ego_k, ego_m, w1p, b1p, w2p, b2p)

    return out[:N, :Dout]


def reference(norm_dense, ego, w1, b1, w2, b2):
    side = norm_dense @ ego
    sum_emb = jax.nn.leaky_relu((ego + side) @ w1 + b1[0], LEAKY_SLOPE)
    bi_emb = jax.nn.leaky_relu((ego * side) @ w2 + b2[0], LEAKY_SLOPE)
    return bi_emb + sum_emb


if __name__ == "__main__":
    # N deliberately not a multiple of 128/256 to exercise the padding path.
    N, D, Dout = 500, 128, 128

    key = jax.random.PRNGKey(0)
    k_mask, k_blk, k_vals, k_ego, k_w1, k_b1, k_w2, k_b2 = jax.random.split(key, 8)

    # Block-structured ~5%-dense normalized adjacency (densified only for this
    # demo; the kernel itself exploits the block-level sparsity).
    BLK = 128
    nb = (N + BLK - 1) // BLK
    elem_mask = (jax.random.uniform(k_mask, (N, N)) < 0.05).astype(jnp.float32)
    blk_mask = (jax.random.uniform(k_blk, (nb, nb)) < 0.5).astype(jnp.float32)
    blk_mask = jnp.repeat(jnp.repeat(blk_mask, BLK, axis=0), BLK, axis=1)[:N, :N]
    vals = jax.random.uniform(k_vals, (N, N), dtype=jnp.float32)
    norm_dense = elem_mask * blk_mask * vals
    row_sum = jnp.maximum(norm_dense.sum(axis=1, keepdims=True), 1e-6)
    norm_dense = norm_dense / row_sum

    ego = jax.random.normal(k_ego, (N, D), dtype=jnp.float32)

    # Linear params stored as [in_dim, out_dim] (transposed vs torch .weight).
    lim = 1.0 / (D ** 0.5)
    w1 = jax.random.uniform(k_w1, (D, Dout), minval=-lim, maxval=lim,
                            dtype=jnp.float32)
    b1 = jax.random.uniform(k_b1, (1, Dout), minval=-lim, maxval=lim,
                            dtype=jnp.float32)
    w2 = jax.random.uniform(k_w2, (D, Dout), minval=-lim, maxval=lim,
                            dtype=jnp.float32)
    b2 = jax.random.uniform(k_b2, (1, Dout), minval=-lim, maxval=lim,
                            dtype=jnp.float32)

    ref = reference(norm_dense, ego, w1, b1, w2, b2)

    # Exact-arithmetic path (f32 MXU inputs), small tiles so the K-blocked
    # accumulator, block-skipping and padding paths are all exercised.
    out_f32 = bi_aggregator(norm_dense, ego, w1, b1, w2, b2,
                            tm=128, kn=128, matmul_dtype=jnp.float32)
    out_f32 = jax.block_until_ready(out_f32)
    assert out_f32.shape == (N, Dout)
    assert jnp.allclose(out_f32, ref, atol=1e-4, rtol=1e-4), \
        "f32 kernel mismatch vs reference"

    # Default fast path: bf16 adjacency/ego spmm inputs, tm=256 (MXU width).
    out_bf16 = bi_aggregator(norm_dense, ego, w1, b1, w2, b2)
    out_bf16 = jax.block_until_ready(out_bf16)
    assert out_bf16.shape == (N, Dout)
    assert jnp.allclose(out_bf16, ref, atol=2e-2, rtol=2e-2), \
        "bf16 kernel mismatch vs reference"

    print("KERNEL_OK")
</pallas_src>

<mosaic_0001>
module attributes {stable_mosaic.version = 11 : i64} {
  func.func @bi_aggregator_kernel(%arg0: i32, %arg1: i32, %arg2: memref<16xi32, #tpu.memory_space<smem>>, %arg3: memref<4xi32, #tpu.memory_space<smem>>, %arg4: memref<128x128xf32, #tpu.memory_space<vmem>>, %arg5: memref<128x128xf32, #tpu.memory_space<vmem>>, %arg6: memref<128x128xf32, #tpu.memory_space<vmem>>, %arg7: memref<128x128xf32, #tpu.memory_space<vmem>>, %arg8: memref<1x128xf32, #tpu.memory_space<vmem>>, %arg9: memref<128x128xf32, #tpu.memory_space<vmem>>, %arg10: memref<1x128xf32, #tpu.memory_space<vmem>>, %arg11: memref<128x128xf32, #tpu.memory_space<vmem>>, %arg12: memref<128x128xf32, #tpu.memory_space<vmem>>) attributes {dimension_semantics = [#tpu.dimension_semantics<parallel>, #tpu.dimension_semantics<arbitrary>], iteration_bounds = array<i64: 4, 4>, scalar_prefetch = 2 : i64, scratch_operands = 1 : i64, tpu.core_type = #tpu.core_type<tc>, window_params = [{transform_indices = @transform_0, window_bounds = array<i64: 128, 128>}, {transform_indices = @transform_1, window_bounds = array<i64: 128, 128>}, {transform_indices = @transform_2, window_bounds = array<i64: 128, 128>}, {pipeline_mode = #tpu.pipeline_mode<synchronous>, transform_indices = @transform_3, window_bounds = array<i64: 128, 128>}, {pipeline_mode = #tpu.pipeline_mode<synchronous>, transform_indices = @transform_4, window_bounds = array<i64: 1, 128>}, {pipeline_mode = #tpu.pipeline_mode<synchronous>, transform_indices = @transform_5, window_bounds = array<i64: 128, 128>}, {pipeline_mode = #tpu.pipeline_mode<synchronous>, transform_indices = @transform_6, window_bounds = array<i64: 1, 128>}, {transform_indices = @transform_7, window_bounds = array<i64: 128, 128>}]} {
    %c0_i32 = arith.constant 0 : i32
    %0 = arith.cmpi eq, %arg1, %c0_i32 : i32
    %1 = arith.extui %0 : i1 to i32
    %c0_i32_0 = arith.constant 0 : i32
    %2 = arith.cmpi ne, %1, %c0_i32_0 : i32
    scf.if %2 {
      %cst = arith.constant 0.000000e+00 : f32
      %11 = vector.broadcast %cst : f32 to vector<128x128xf32>
      %c0 = arith.constant 0 : index
      %c0_3 = arith.constant 0 : index
      %12 = vector.load %arg12[%c0, %c0_3] : memref<128x128xf32, #tpu.memory_space<vmem>>, vector<128x128xf32>
      tpu.vector_store %arg12[%c0, %c0_3], %11 {strides = array<i32>} : memref<128x128xf32, #tpu.memory_space<vmem>>, vector<128x128xf32>,
    } else {
    }
    %3 = arith.index_cast %arg0 : i32 to index
    %4 = memref.load %arg3[%3] : memref<4xi32, #tpu.memory_space<smem>>
    %5 = arith.cmpi slt, %arg1, %4 : i32
    %6 = arith.extui %5 : i1 to i32
    %c0_i32_1 = arith.constant 0 : i32
    %7 = arith.cmpi ne, %6, %c0_i32_1 : i32
    scf.if %7 {
      %c0 = arith.constant 0 : index
      %c0_3 = arith.constant 0 : index
      %11 = vector.load %arg12[%c0, %c0_3] : memref<128x128xf32, #tpu.memory_space<vmem>>, vector<128x128xf32>
      %c0_4 = arith.constant 0 : index
      %c0_5 = arith.constant 0 : index
      %12 = vector.load %arg4[%c0_4, %c0_5] : memref<128x128xf32, #tpu.memory_space<vmem>>, vector<128x128xf32>
      %c0_6 = arith.constant 0 : index
      %c0_7 = arith.constant 0 : index
      %13 = vector.load %arg5[%c0_6, %c0_7] : memref<128x128xf32, #tpu.memory_space<vmem>>, vector<128x128xf32>
      %cst = arith.constant dense<0.000000e+00> : vector<128x128xf32>
      %14 = tpu.matmul %12, %13, %cst {dimension_numbers = #tpu.dot_dimension_numbers<[1], [0], [0], [1], [0, 0, 1, 1], [], []>} : vector<128x128xf32>, vector<128x128xf32>, vector<128x128xf32> -> vector<128x128xf32>
      %15 = arith.addf %11, %14 : vector<128x128xf32>
      %c0_8 = arith.constant 0 : index
      %c0_9 = arith.constant 0 : index
      %16 = vector.load %arg12[%c0_8, %c0_9] : memref<128x128xf32, #tpu.memory_space<vmem>>, vector<128x128xf32>
      tpu.vector_store %arg12[%c0_8, %c0_9], %15 {strides = array<i32>} : memref<128x128xf32, #tpu.memory_space<vmem>>, vector<128x128xf32>,
    } else {
    }
    %c3_i32 = arith.constant 3 : i32
    %8 = arith.cmpi eq, %arg1, %c3_i32 : i32
    %9 = arith.extui %8 : i1 to i32
    %c0_i32_2 = arith.constant 0 : i32
    %10 = arith.cmpi ne, %9, %c0_i32_2 : i32
    scf.if %10 {
      %c0 = arith.constant 0 : index
      %c0_3 = arith.constant 0 : index
      %11 = vector.load %arg12[%c0, %c0_3] : memref<128x128xf32, #tpu.memory_space<vmem>>, vector<128x128xf32>
      %c0_4 = arith.constant 0 : index
      %c0_5 = arith.constant 0 : index
      %12 = vector.load %arg6[%c0_4, %c0_5] : memref<128x128xf32, #tpu.memory_space<vmem>>, vector<128x128xf32>
      %13 = arith.addf %12, %11 : vector<128x128xf32>
      %c0_6 = arith.constant 0 : index
      %c0_7 = arith.constant 0 : index
      %14 = vector.load %arg7[%c0_6, %c0_7] : memref<128x128xf32, #tpu.memory_space<vmem>>, vector<128x128xf32>
      %cst = arith.constant dense<0.000000e+00> : vector<128x128xf32>
      %15 = tpu.matmul %13, %14, %cst {dimension_numbers = #tpu.dot_dimension_numbers<[1], [0], [0], [1], [0, 0, 1, 1], [], []>} : vector<128x128xf32>, vector<128x128xf32>, vector<128x128xf32> -> vector<128x128xf32>
      %c0_8 = arith.constant 0 : index
      %c0_9 = arith.constant 0 : index
      %16 = vector.load %arg8[%c0_8, %c0_9] : memref<1x128xf32, #tpu.memory_space<vmem>>, vector<1x128xf32>
      %17 = vector.broadcast %16 : vector<1x128xf32> to vector<128x128xf32>
      %18 = arith.addf %15, %17 : vector<128x128xf32>
      %cst_10 = arith.constant 0.000000e+00 : f32
      %19 = vector.broadcast %cst_10 : f32 to vector<128x128xf32>
      %20 = arith.cmpf oge, %18, %19 : vector<128x128xf32>
      %cst_11 = arith.constant 0.00999999977 : f32
      %21 = vector.broadcast %cst_11 : f32 to vector<128x128xf32>
      %22 = arith.mulf %21, %18 : vector<128x128xf32>
      %23 = arith.select %20, %18, %22 : vector<128x128xi1>, vector<128x128xf32>
      %24 = arith.mulf %12, %11 : vector<128x128xf32>
      %c0_12 = arith.constant 0 : index
      %c0_13 = arith.constant 0 : index
      %25 = vector.load %arg9[%c0_12, %c0_13] : memref<128x128xf32, #tpu.memory_space<vmem>>, vector<128x128xf32>
      %cst_14 = arith.constant dense<0.000000e+00> : vector<128x128xf32>
      %26 = tpu.matmul %24, %25, %cst_14 {dimension_numbers = #tpu.dot_dimension_numbers<[1], [0], [0], [1], [0, 0, 1, 1], [], []>} : vector<128x128xf32>, vector<128x128xf32>, vector<128x128xf32> -> vector<128x128xf32>
      %c0_15 = arith.constant 0 : index
      %c0_16 = arith.constant 0 : index
      %27 = vector.load %arg10[%c0_15, %c0_16] : memref<1x128xf32, #tpu.memory_space<vmem>>, vector<1x128xf32>
      %28 = vector.broadcast %27 : vector<1x128xf32> to vector<128x128xf32>
      %29 = arith.addf %26, %28 : vector<128x128xf32>
      %cst_17 = arith.constant 0.000000e+00 : f32
      %30 = vector.broadcast %cst_17 : f32 to vector<128x128xf32>
      %31 = arith.cmpf oge, %29, %30 : vector<128x128xf32>
      %cst_18 = arith.constant 0.00999999977 : f32
      %32 = vector.broadcast %cst_18 : f32 to vector<128x128xf32>
      %33 = arith.mulf %32, %29 : vector<128x128xf32>
      %34 = arith.select %31, %29, %33 : vector<128x128xi1>, vector<128x128xf32>
      %35 = arith.addf %34, %23 : vector<128x128xf32>
      %c0_19 = arith.constant 0 : index
      %c0_20 = arith.constant 0 : index
      %36 = vector.load %arg11[%c0_19, %c0_20] : memref<128x128xf32, #tpu.memory_space<vmem>>, vector<128x128xf32>
      tpu.vector_store %arg11[%c0_19, %c0_20], %35 {strides = array<i32>} : memref<128x128xf32, #tpu.memory_space<vmem>>, vector<128x128xf32>,
    } else {
    }
    return
  }
  func.func @transform_0(%arg0: i32, %arg1: i32, %arg2: memref<16xi32, #tpu.memory_space<smem>>, %arg3: memref<4xi32, #tpu.memory_space<smem>>) -> (i32, i32) {
    %c4_i32 = arith.constant 4 : i32
    %0 = arith.muli %arg0, %c4_i32 : i32
    %1 = arith.addi %0, %arg1 : i32
    %2 = arith.index_cast %1 : i32 to index
    %3 = memref.load %arg2[%2] : memref<16xi32, #tpu.memory_space<smem>>
    %c0_i32 = arith.constant 0 : i32
    return %arg0, %3 : i32, i32
  }
  func.func @transform_1(%arg0: i32, %arg1: i32, %arg2: memref<16xi32, #tpu.memory_space<smem>>, %arg3: memref<4xi32, #tpu.memory_space<smem>>) -> (i32, i32) {
    %c4_i32 = arith.constant 4 : i32
    %0 = arith.muli %arg0, %c4_i32 : i32
    %1 = arith.addi %0, %arg1 : i32
    %2 = arith.index_cast %1 : i32 to index
    %3 = memref.load %arg2[%2] : memref<16xi32, #tpu.memory_space<smem>>
    %c0_i32 = arith.constant 0 : i32
    %c0_i32_0 = arith.constant 0 : i32
    return %3, %c0_i32 : i32, i32
  }
  func.func @transform_2(%arg0: i32, %arg1: i32, %arg2: memref<16xi32, #tpu.memory_space<smem>>, %arg3: memref<4xi32, #tpu.memory_space<smem>>) -> (i32, i32) {
    %c0_i32 = arith.constant 0 : i32
    %c0_i32_0 = arith.constant 0 : i32
    return %arg0, %c0_i32 : i32, i32
  }
  func.func @transform_3(%arg0: i32, %arg1: i32, %arg2: memref<16xi32, #tpu.memory_space<smem>>, %arg3: memref<4xi32, #tpu.memory_space<smem>>) -> (i32, i32) {
    %c0_i32 = arith.constant 0 : i32
    %c0_i32_0 = arith.constant 0 : i32
    %c0_i32_1 = arith.constant 0 : i32
    return %c0_i32, %c0_i32_0 : i32, i32
  }
  func.func @transform_4(%arg0: i32, %arg1: i32, %arg2: memref<16xi32, #tpu.memory_space<smem>>, %arg3: memref<4xi32, #tpu.memory_space<smem>>) -> (i32, i32) {
    %c0_i32 = arith.constant 0 : i32
    %c0_i32_0 = arith.constant 0 : i32
    %c0_i32_1 = arith.constant 0 : i32
    return %c0_i32, %c0_i32_0 : i32, i32
  }
  func.func @transform_5(%arg0: i32, %arg1: i32, %arg2: memref<16xi32, #tpu.memory_space<smem>>, %arg3: memref<4xi32, #tpu.memory_space<smem>>) -> (i32, i32) {
    %c0_i32 = arith.constant 0 : i32
    %c0_i32_0 = arith.constant 0 : i32
    %c0_i32_1 = arith.constant 0 : i32
    return %c0_i32, %c0_i32_0 : i32, i32
  }
  func.func @transform_6(%arg0: i32, %arg1: i32, %arg2: memref<16xi32, #tpu.memory_space<smem>>, %arg3: memref<4xi32, #tpu.memory_space<smem>>) -> (i32, i32) {
    %c0_i32 = arith.constant 0 : i32
    %c0_i32_0 = arith.constant 0 : i32
    %c0_i32_1 = arith.constant 0 : i32
    return %c0_i32, %c0_i32_0 : i32, i32
  }
  func.func @transform_7(%arg0: i32, %arg1: i32, %arg2: memref<16xi32, #tpu.memory_space<smem>>, %arg3: memref<4xi32, #tpu.memory_space<smem>>) -> (i32, i32) {
    %c0_i32 = arith.constant 0 : i32
    %c0_i32_0 = arith.constant 0 : i32
    return %arg0, %c0_i32 : i32, i32
  }
}

</mosaic_0001>

<llo_original>
// kernel: bi_aggregator.1
$region0: #{bi_aggregator.1}
  #allocation0 [shape = 'u32[]', space=smem, size = 0x4, offset = 0x4, fixed_abs, tag = 'smem constant byte address 0x4 - core index']
  #allocation1 [shape = 'u32[144,128]{1,0:T(1,128)}', space=vmem, size = 0x12000, scoped, tag = 'internal scratch']
  #allocation2 [shape = 'f32[128,128]{1,0:T(8,128)}', space=vmem, size = 0x10000, scoped, tag = 'scratch operand']
  #allocation3 [shape = 's32[1]{0}', space=sflag, size = 0x4, scoped, tag = 'scoped memory for bi_aggregator.1']
  #allocation4 [shape = 'u8[512]{0}', space=smem, size = 0x200, scoped, tag = 'prefetched SMEM operand 0']
  #allocation5 [shape = 'u8[512]{0}', space=smem, size = 0x200, scoped, tag = 'prefetched SMEM operand 1']
  %s0 = inlined_call_operand.vmem [shape: s32[16], index: 0, kind: input, shape index: {}]
  %s1 = inlined_call_operand.vmem [shape: s32[4], index: 1, kind: input, shape index: {}]
  %s2 = inlined_call_operand.vmem [shape: f32[512,512], index: 2, kind: input, shape index: {}]
  %s3 = inlined_call_operand.vmem [shape: f32[512,128], index: 3, kind: input, shape index: {}, may-alias: {3,4}]
  %s4 = inlined_call_operand.vmem [shape: f32[512,128], index: 4, kind: input, shape index: {}, may-alias: {3,4}]
  %s5 = inlined_call_operand.vmem [shape: f32[128,128], index: 5, kind: input, shape index: {}]
  %s6 = inlined_call_operand.vmem [shape: f32[1,128], index: 6, kind: input, shape index: {}]
  %s7 = inlined_call_operand.vmem [shape: f32[128,128], index: 7, kind: input, shape index: {}]
  %s8 = inlined_call_operand.vmem [shape: f32[1,128], index: 8, kind: input, shape index: {}]
  %s9 = inlined_call_operand.vmem [shape: f32[512,128], index: 9, kind: output, shape index: {}]
  %s10 = sld [smem:[#allocation0]]
  $region111: #{bi_aggregator.1} parent=0
    _
  %s12 = ssub.s32 1, %s10
  %s13 = scalar_select 0, %s12, %s10
  %s14 = sshll.u32 %s0, 4
  %s15 = int_to_ptr.vmem [resolvable:$true] %s14
  %17 = dma.vmem_to_smem %s15, 16, [#allocation4], [#allocation3]
  %s18 = sshll.u32 %s1, 4
  %s19 = int_to_ptr.vmem [resolvable:$true] %s18
  %21 = dma.vmem_to_smem %s19, 16, [#allocation5], [#allocation3]
  %22 = dma.done [#allocation3], 32
  %23 = sfence
  $region1: #{bi_aggregator.1} parent=0
    #allocation6 [shape = 'u8[131072]{0}', space=vmem, size = 0x20000, scoped, tag = 'input window, operand 2']
    loop: start=0, step=1, limit=18
    $region2: #{bi_aggregator.1} parent=1 // loop_pre_header
      _
    $region3: #{bi_aggregator.1} parent=1 // loop_header
      %s25 = sphi 0, %s29
      %p26 = scmp.ge.s32.totalorder %s25, 18
      %s32 = sphi 0, %s44
      %s33 = sphi 0, %s40
      %s34 = sphi 0, %s32
      %s35 = sphi 0, %s33
      %s36 = sphi 0, %s34
      %s37 = sphi 0, %s35
      %s55 = sphi 0, %s57
      %s58 = sphi 0, %s55
      %s59 = sphi 0, %s58
      %s75 = sphi 0, %s59
      %s87 = sphi 0, %s89
      %s90 = sphi 0, %s87
      %s91 = sphi 0, %s90
      %s107 = sphi 0, %s91
      %s113 = sphi 0, %s115
      %s116 = sphi 0, %s113
      %s117 = sphi 0, %s116
      %s133 = sphi 0, %s117
      %s137 = sphi 0, %s137
      %s139 = sphi 0, %s137
      %s140 = sphi 0, %s139
      %s154 = sphi 0, %s140
      %s158 = sphi 0, %s158
      %s160 = sphi 0, %s158
      %s161 = sphi 0, %s160
      %s175 = sphi 0, %s161
      %s179 = sphi 0, %s179
      %s181 = sphi 0, %s179
      %s182 = sphi 0, %s181
      %s196 = sphi 0, %s182
      %s200 = sphi 0, %s200
      %s202 = sphi 0, %s200
      %s203 = sphi 0, %s202
      %s217 = sphi 0, %s203
      %s223 = sphi 0, %s225
      %s226 = sphi 0, %s223
      %s227 = sphi 0, %s226
      %s243 = sphi 0, %s227
    $region4: #{bi_aggregator.1} parent=1 // loop_header_branch
      %28 = sbr.rel (%p26) target = $region8
    $region5: #{bi_aggregator.1} parent=1 // loop_body
      %s30 = ssub.s32 %s25, 1
      %s31 = ssub.s32 %s25, 2
      %s38 = sadd.s32 1, %s33
      %p39 = scmp.ge.s32.totalorder %s38, 4
      %s40 = scalar_select %p39, 0, %s38
      %s41 = sadd.s32 1, %s32
      %s42 = scalar_select %p39, %s41, %s32
      %p43 = scmp.ge.s32.totalorder %s42, 4
      %s44 = scalar_select %p43, 0, %s42
      %s45 = smul.u32 %s32, 4
      %s46 = sadd.s32 %s45, %s33
      %s47 = sld [smem:[#allocation4 + %s46]]
      %s48 = smul.u32 %s44, 4
      %s49 = sadd.s32 %s48, %s40
      %s50 = sld [smem:[#allocation4 + %s49]]
      %s51 = ssub.s32 %s32, %s44
      %s52 = ssub.s32 %s47, %s50
      %s53 = sor.u32 %s51, %s52
      %p54 = scmp.eq.s32.totalorder %s53, 0
      %s56 = sadd.s32 %s55, 1
      %s57 = scalar_select %p54, %s55, %s56
      %p60 = pneg %p54
      %p61 = scmp.eq.s32.totalorder %s25, 15
      %p62 = por %p60, %p61
      %p63 = scmp.ne.s32.totalorder %s55, %s58
      %p64 = scmp.eq.s32.totalorder %s25, 0
      %p65 = por %p63, %p64
      %p66 = scmp.ne.s32.totalorder %s55, %s58
      %p67 = scmp.eq.s32.totalorder %s30, 15
      %p68 = por %p66, %p67
      %p69 = scmp.ne.s32.totalorder %s58, %s59
      %p70 = scmp.eq.s32.totalorder %s30, 0
      %p71 = por %p69, %p70
      %p72 = scmp.ne.s32.totalorder %s58, %s59
      %p73 = scmp.eq.s32.totalorder %s31, 15
      %p74 = por %p72, %p73
      %p76 = scmp.ne.s32.totalorder %s59, %s75
      %p77 = scmp.eq.s32.totalorder %s31, 0
      %p78 = por %p76, %p77
      %s79 = smul.u32 %s32, 4
      %s80 = sadd.s32 %s79, %s33
      %s81 = sld [smem:[#allocation4 + %s80]]
      %s82 = smul.u32 %s44, 4
      %s83 = sadd.s32 %s82, %s40
      %s84 = sld [smem:[#allocation4 + %s83]]
      %s85 = ssub.s32 %s81, %s84
      %p86 = scmp.eq.s32.totalorder %s85, 0
      %s88 = sadd.s32 %s87, 1
      %s89 = scalar_select %p86, %s87, %s88
      %p92 = pneg %p86
      %p93 = scmp.eq.s32.totalorder %s25, 15
      %p94 = por %p92, %p93
      %p95 = scmp.ne.s32.totalorder %s87, %s90
      %p96 = scmp.eq.s32.totalorder %s25, 0
      %p97 = por %p95, %p96
      %p98 = scmp.ne.s32.totalorder %s87, %s90
      %p99 = scmp.eq.s32.totalorder %s30, 15
      %p100 = por %p98, %p99
      %p101 = scmp.ne.s32.totalorder %s90, %s91
      %p102 = scmp.eq.s32.totalorder %s30, 0
      %p103 = por %p101, %p102
      %p104 = scmp.ne.s32.totalorder %s90, %s91
      %p105 = scmp.eq.s32.totalorder %s31, 15
      %p106 = por %p104, %p105
      %p108 = scmp.ne.s32.totalorder %s91, %s107
      %p109 = scmp.eq.s32.totalorder %s31, 0
      %p110 = por %p108, %p109
      %s111 = ssub.s32 %s32, %s44
      %p112 = scmp.eq.s32.totalorder %s111, 0
      %s114 = sadd.s32 %s113, 1
      %s115 = scalar_select %p112, %s113, %s114
      %p118 = pneg %p112
      %p119 = scmp.eq.s32.totalorder %s25, 15
      %p120 = por %p118, %p119
      %p121 = scmp.ne.s32.totalorder %s113, %s116
      %p122 = scmp.eq.s32.totalorder %s25, 0
      %p123 = por %p121, %p122
      %p124 = scmp.ne.s32.totalorder %s113, %s116
      %p125 = scmp.eq.s32.totalorder %s30, 15
      %p126 = por %p124, %p125
      %p127 = scmp.ne.s32.totalorder %s116, %s117
      %p128 = scmp.eq.s32.totalorder %s30, 0
      %p129 = por %p127, %p128
      %p130 = scmp.ne.s32.totalorder %s116, %s117
      %p131 = scmp.eq.s32.totalorder %s31, 15
      %p132 = por %p130, %p131
      %p134 = scmp.ne.s32.totalorder %s117, %s133
      %p135 = scmp.eq.s32.totalorder %s31, 0
      %p136 = por %p134, %p135
      %s138 = sadd.s32 %s137, 1
      %p141 = scmp.eq.s32.totalorder %s25, 15
      %p142 = scmp.ne.s32.totalorder %s137, %s139
      %p143 = scmp.eq.s32.totalorder %s25, 0
      %p144 = por %p142, %p143
      %p145 = scmp.ne.s32.totalorder %s137, %s139
      %p146 = scmp.eq.s32.totalorder %s30, 15
      %p147 = por %p145, %p146
      %p148 = scmp.ne.s32.totalorder %s139, %s140
      %p149 = scmp.eq.s32.totalorder %s30, 0
      %p150 = por %p148, %p149
      %p151 = scmp.ne.s32.totalorder %s139, %s140
      %p152 = scmp.eq.s32.totalorder %s31, 15
      %p153 = por %p151, %p152
      %p155 = scmp.ne.s32.totalorder %s140, %s154
      %p156 = scmp.eq.s32.totalorder %s31, 0
      %p157 = por %p155, %p156
      %s159 = sadd.s32 %s158, 1
      %p162 = scmp.eq.s32.totalorder %s25, 15
      %p163 = scmp.ne.s32.totalorder %s158, %s160
      %p164 = scmp.eq.s32.totalorder %s25, 0
      %p165 = por %p163, %p164
      %p166 = scmp.ne.s32.totalorder %s158, %s160
      %p167 = scmp.eq.s32.totalorder %s30, 15
      %p168 = por %p166, %p167
      %p169 = scmp.ne.s32.totalorder %s160, %s161
      %p170 = scmp.eq.s32.totalorder %s30, 0
      %p171 = por %p169, %p170
      %p172 = scmp.ne.s32.totalorder %s160, %s161
      %p173 = scmp.eq.s32.totalorder %s31, 15
      %p174 = por %p172, %p173
      %p176 = scmp.ne.s32.totalorder %s161, %s175
      %p177 = scmp.eq.s32.totalorder %s31, 0
      %p178 = por %p176, %p177
      %s180 = sadd.s32 %s179, 1
      %p183 = scmp.eq.s32.totalorder %s25, 15
      %p184 = scmp.ne.s32.totalorder %s179, %s181
      %p185 = scmp.eq.s32.totalorder %s25, 0
      %p186 = por %p184, %p185
      %p187 = scmp.ne.s32.totalorder %s179, %s181
      %p188 = scmp.eq.s32.totalorder %s30, 15
      %p189 = por %p187, %p188
      %p190 = scmp.ne.s32.totalorder %s181, %s182
      %p191 = scmp.eq.s32.totalorder %s30, 0
      %p192 = por %p190, %p191
      %p193 = scmp.ne.s32.totalorder %s181, %s182
      %p194 = scmp.eq.s32.totalorder %s31, 15
      %p195 = por %p193, %p194
      %p197 = scmp.ne.s32.totalorder %s182, %s196
      %p198 = scmp.eq.s32.totalorder %s31, 0
      %p199 = por %p197, %p198
      %s201 = sadd.s32 %s200, 1
      %p204 = scmp.eq.s32.totalorder %s25, 15
      %p205 = scmp.ne.s32.totalorder %s200, %s202
      %p206 = scmp.eq.s32.totalorder %s25, 0
      %p207 = por %p205, %p206
      %p208 = scmp.ne.s32.totalorder %s200, %s202
      %p209 = scmp.eq.s32.totalorder %s30, 15
      %p210 = por %p208, %p209
      %p211 = scmp.ne.s32.totalorder %s202, %s203
      %p212 = scmp.eq.s32.totalorder %s30, 0
      %p213 = por %p211, %p212
      %p214 = scmp.ne.s32.totalorder %s202, %s203
      %p215 = scmp.eq.s32.totalorder %s31, 15
      %p216 = por %p214, %p215
      %p218 = scmp.ne.s32.totalorder %s203, %s217
      %p219 = scmp.eq.s32.totalorder %s31, 0
      %p220 = por %p218, %p219
      %s221 = ssub.s32 %s32, %s44
      %p222 = scmp.eq.s32.totalorder %s221, 0
      %s224 = sadd.s32 %s223, 1
      %s225 = scalar_select %p222, %s223, %s224
      %p228 = pneg %p222
      %p229 = scmp.eq.s32.totalorder %s25, 15
      %p230 = por %p228, %p229
      %p231 = scmp.ne.s32.totalorder %s223, %s226
      %p232 = scmp.eq.s32.totalorder %s25, 0
      %p233 = por %p231, %p232
      %p234 = scmp.ne.s32.totalorder %s223, %s226
      %p235 = scmp.eq.s32.totalorder %s30, 15
      %p236 = por %p234, %p235
      %p237 = scmp.ne.s32.totalorder %s226, %s227
      %p238 = scmp.eq.s32.totalorder %s30, 0
      %p239 = por %p237, %p238
      %p240 = scmp.ne.s32.totalorder %s226, %s227
      %p241 = scmp.eq.s32.totalorder %s31, 15
      %p242 = por %p240, %p241
      %p244 = scmp.ne.s32.totalorder %s227, %s243
      %p245 = scmp.eq.s32.totalorder %s31, 0
      %p246 = por %p244, %p245
      %p247 = scmp.le.s32.totalorder 1, %s25
      %p248 = scmp.lt.s32.totalorder %s25, 17
      %p249 = pnand %p247, %p248
      %p250 = pneg %p249
      // Predicated region
      $region9: #{bi_aggregator.1} parent=5 // pred_check
        _
      $region10: #{bi_aggregator.1} parent=5 // pred_check_branch
        %252 = sbr.rel (%p249) target = $region12
      $region11: #{bi_aggregator.1} parent=5 // pred_region
        %s253 = ssub.s32 %s25, 1
        // Predicated region
        $region13: #{bi_aggregator.1} parent=11 // pred_check
          %p254 = pneg %p150
        $region14: #{bi_aggregator.1} parent=11 // pred_check_branch
          %256 = sbr.rel (%p254) target = $region16
        $region15: #{bi_aggregator.1} parent=11 // pred_region
          _
        $region16: #{bi_aggregator.1} parent=11 // pred_fallthru
          _
        // Predicated region
        $region17: #{bi_aggregator.1} parent=11 // pred_check
          %p257 = pneg %p171
        $region18: #{bi_aggregator.1} parent=11 // pred_check_branch
          %259 = sbr.rel (%p257) target = $region20
        $region19: #{bi_aggregator.1} parent=11 // pred_region
          _
        $region20: #{bi_aggregator.1} parent=11 // pred_fallthru
          _
        // Predicated region
        $region21: #{bi_aggregator.1} parent=11 // pred_check
          %p260 = pneg %p192
        $region22: #{bi_aggregator.1} parent=11 // pred_check_branch
          %262 = sbr.rel (%p260) target = $region24
        $region23: #{bi_aggregator.1} parent=11 // pred_region
          _
        $region24: #{bi_aggregator.1} parent=11 // pred_fallthru
          _
        // Predicated region
        $region25: #{bi_aggregator.1} parent=11 // pred_check
          %p263 = pneg %p213
        $region26: #{bi_aggregator.1} parent=11 // pred_check_branch
          %265 = sbr.rel (%p263) target = $region28
        $region27: #{bi_aggregator.1} parent=11 // pred_region
          _
        $region28: #{bi_aggregator.1} parent=11 // pred_fallthru
          _
      $region12: #{bi_aggregator.1} parent=5 // pred_fallthru
        _
      %p266 = scmp.lt.s32.totalorder %s25, 16
      // Predicated region
      $region29: #{bi_aggregator.1} parent=5 // pred_check
        %p267 = pneg %p266
      $region30: #{bi_aggregator.1} parent=5 // pred_check_branch
        %269 = sbr.rel (%p267) target = $region32
      $region31: #{bi_aggregator.1} parent=5 // pred_region
        // Predicated region
        $region33: #{bi_aggregator.1} parent=31 // pred_check
          %p270 = pneg %p65
        $region34: #{bi_aggregator.1} parent=31 // pred_check_branch
          %272 = sbr.rel (%p270) target = $region36
        $region35: #{bi_aggregator.1} parent=31 // pred_region
          %s273 = sand.u32 %s55, 1
          %s274 = sand.u32 %s55, 1
          %s275 = smul.addr %s274, 128
          %s276 = scalar_lea.vmem [#allocation6], %s275
          %s277 = smul.u32 %s32, 4
          %s278 = sadd.s32 %s277, %s33
          %s279 = sld [smem:[#allocation4 + %s278]]
          %s280 = smul.u32 16, %s32
          %s281 = smul.addr %s280, 4
          %s282 = sadd.s32 %s279, %s281
          %s283 = smul.addr %s282, 8
          %s284 = scalar_lea.vmem %s2, %s283
          // Predicated region
          $region37: #{bi_aggregator.1} parent=35 // pred_check
            _
          $region38: #{bi_aggregator.1} parent=35 // pred_check_branch
            %286 = sbr.rel (0) target = $region40
          $region39: #{bi_aggregator.1} parent=35 // pred_region
            // Predicated region
            $region41: #{bi_aggregator.1} parent=39 // pred_check
              _
            $region42: #{bi_aggregator.1} parent=39 // pred_check_branch
              %288 = sbr.rel (0) target = $region44
            $region43: #{bi_aggregator.1} parent=39 // pred_region
              // Predicated region
              $region56: #{bi_aggregator.1} parent=43 // pred_check
                _
              $region57: #{bi_aggregator.1} parent=43 // pred_check_branch
                %333 = sbr.rel (0) target = $region59
              $region58: #{bi_aggregator.1} parent=43 // pred_region
                loop: start=0, step=1, limit=1
                $region60: #{bi_aggregator.1} parent=58 // loop_pre_header
                  _
                $region61: #{bi_aggregator.1} parent=58 // loop_header
                  %s335 = sphi 0, %s339
                  %p336 = scmp.ge.s32.totalorder %s335, 1
                  %s340 = sphi %s284, %s284
                  %s341 = sphi %s276, %s276
                $region62: #{bi_aggregator.1} parent=58 // loop_header_branch
                  %338 = sbr.rel (%p336) target = $region66
                $region63: #{bi_aggregator.1} parent=58 // loop_body
                  %v342 = vld [vmem:[%s340] sm:$0xff]
                  %343 = vst [vmem:[%s341] sm:$0xff] %v342
                  %v344 = vld [vmem:[%s340 + $0x20] sm:$0xff]
                  %345 = vst [vmem:[%s341 + $0x8] sm:$0xff] %v344
                  %v346 = vld [vmem:[%s340 + $0x40] sm:$0xff]
                  %347 = vst [vmem:[%s341 + $0x10] sm:$0xff] %v346
                  %v348 = vld [vmem:[%s340 + $0x60] sm:$0xff]
                  %349 = vst [vmem:[%s341 + $0x18] sm:$0xff] %v348
                  %v350 = vld [vmem:[%s340 + $0x80] sm:$0xff]
                  %351 = vst [vmem:[%s341 + $0x20] sm:$0xff] %v350
                  %v352 = vld [vmem:[%s340 + $0xa0] sm:$0xff]
                  %353 = vst [vmem:[%s341 + $0x28] sm:$0xff] %v352
                  %v354 = vld [vmem:[%s340 + $0xc0] sm:$0xff]
                  %355 = vst [vmem:[%s341 + $0x30] sm:$0xff] %v354
                  %v356 = vld [vmem:[%s340 + $0xe0] sm:$0xff]
                  %357 = vst [vmem:[%s341 + $0x38] sm:$0xff] %v356
                  %v358 = vld [vmem:[%s340 + $0x100] sm:$0xff]
                  %359 = vst [vmem:[%s341 + $0x40] sm:$0xff] %v358
                  %v360 = vld [vmem:[%s340 + $0x120] sm:$0xff]
                  %361 = vst [vmem:[%s341 + $0x48] sm:$0xff] %v360
                  %v362 = vld [vmem:[%s340 + $0x140] sm:$0xff]
                  %363 = vst [vmem:[%s341 + $0x50] sm:$0xff] %v362
                  %v364 = vld [vmem:[%s340 + $0x160] sm:$0xff]
                  %365 = vst [vmem:[%s341 + $0x58] sm:$0xff] %v364
                  %v366 = vld [vmem:[%s340 + $0x180] sm:$0xff]
                  %367 = vst [vmem:[%s341 + $0x60] sm:$0xff] %v366
                  %v368 = vld [vmem:[%s340 + $0x1a0] sm:$0xff]
                  %369 = vst [vmem:[%s341 + $0x68] sm:$0xff] %v368
                  %v370 = vld [vmem:[%s340 + $0x1c0] sm:$0xff]
                  %371 = vst [vmem:[%s341 + $0x70] sm:$0xff] %v370
                  %v372 = vld [vmem:[%s340 + $0x1e0] sm:$0xff]
                  %373 = vst [vmem:[%s341 + $0x78] sm:$0xff] %v372
                $region64: #{bi_aggregator.1} parent=58 // loop_footer
                  %s339 = sadd.s32 1, %s335
                $region65: #{bi_aggregator.1} parent=58 // loop_footer_branch
                  %334 = sbr.rel target = $region61
                $region66: #{bi_aggregator.1} parent=58 // loop_exit
                  _
              $region59: #{bi_aggregator.1} parent=43 // pred_fallthru
                _
              // Predicated region
              $region67: #{bi_aggregator.1} parent=43 // pred_check
                _
              $region68: #{bi_aggregator.1} parent=43 // pred_check_branch
                %375 = sbr.rel target = $region70
              $region69: #{bi_aggregator.1} parent=43 // pred_region
                _
              $region70: #{bi_aggregator.1} parent=43 // pred_fallthru
                _
            $region44: #{bi_aggregator.1} parent=39 // pred_fallthru
              _
            // Predicated region
            $region45: #{bi_aggregator.1} parent=39 // pred_check
              _
            $region46: #{bi_aggregator.1} parent=39 // pred_check_branch
              %290 = sbr.rel target = $region48
            $region47: #{bi_aggregator.1} parent=39 // pred_region
              loop: start=0, step=1, limit=1
              $region49: #{bi_aggregator.1} parent=47 // loop_pre_header
                _
              $region50: #{bi_aggregator.1} parent=47 // loop_header
                %s293 = sphi 0, %s297
                %p294 = scmp.ge.s32.totalorder %s293, 1
                %s298 = sphi %s284, %s284
                %s299 = sphi %s276, %s276
              $region51: #{bi_aggregator.1} parent=47 // loop_header_branch
                %296 = sbr.rel (%p294) target = $region55
              $region52: #{bi_aggregator.1} parent=47 // loop_body
                %v300 = vld [vmem:[%s298] sm:$0xff]
                %301 = vst [vmem:[%s299] sm:$0xff] %v300
                %v302 = vld [vmem:[%s298 + $0x20] sm:$0xff]
                %303 = vst [vmem:[%s299 + $0x8] sm:$0xff] %v302
                %v304 = vld [vmem:[%s298 + $0x40] sm:$0xff]
                %305 = vst [vmem:[%s299 + $0x10] sm:$0xff] %v304
                %v306 = vld [vmem:[%s298 + $0x60] sm:$0xff]
                %307 = vst [vmem:[%s299 + $0x18] sm:$0xff] %v306
                %v308 = vld [vmem:[%s298 + $0x80] sm:$0xff]
                %309 = vst [vmem:[%s299 + $0x20] sm:$0xff] %v308
                %v310 = vld [vmem:[%s298 + $0xa0] sm:$0xff]
                %311 = vst [vmem:[%s299 + $0x28] sm:$0xff] %v310
                %v312 = vld [vmem:[%s298 + $0xc0] sm:$0xff]
                %313 = vst [vmem:[%s299 + $0x30] sm:$0xff] %v312
                %v314 = vld [vmem:[%s298 + $0xe0] sm:$0xff]
                %315 = vst [vmem:[%s299 + $0x38] sm:$0xff] %v314
                %v316 = vld [vmem:[%s298 + $0x100] sm:$0xff]
                %317 = vst [vmem:[%s299 + $0x40] sm:$0xff] %v316
                %v318 = vld [vmem:[%s298 + $0x120] sm:$0xff]
                %319 = vst [vmem:[%s299 + $0x48] sm:$0xff] %v318
                %v320 = vld [vmem:[%s298 + $0x140] sm:$0xff]
                %321 = vst [vmem:[%s299 + $0x50] sm:$0xff] %v320
                %v322 = vld [vmem:[%s298 + $0x160] sm:$0xff]
                %323 = vst [vmem:[%s299 + $0x58] sm:$0xff] %v322
                %v324 = vld [vmem:[%s298 + $0x180] sm:$0xff]
                %325 = vst [vmem:[%s299 + $0x60] sm:$0xff] %v324
                %v326 = vld [vmem:[%s298 + $0x1a0] sm:$0xff]
                %327 = vst [vmem:[%s299 + $0x68] sm:$0xff] %v326
                %v328 = vld [vmem:[%s298 + $0x1c0] sm:$0xff]
                %329 = vst [vmem:[%s299 + $0x70] sm:$0xff] %v328
                %v330 = vld [vmem:[%s298 + $0x1e0] sm:$0xff]
                %331 = vst [vmem:[%s299 + $0x78] sm:$0xff] %v330
              $region53: #{bi_aggregator.1} parent=47 // loop_footer
                %s297 = sadd.s32 1, %s293
              $region54: #{bi_aggregator.1} parent=47 // loop_footer_branch
                %292 = sbr.rel target = $region50
              $region55: #{bi_aggregator.1} parent=47 // loop_exit
                _
            $region48: #{bi_aggregator.1} parent=39 // pred_fallthru
              _
          $region40: #{bi_aggregator.1} parent=35 // pred_fallthru
            _
          %376 = vnop
        $region36: #{bi_aggregator.1} parent=31 // pred_fallthru
          _
        // Predicated region
        $region71: #{bi_aggregator.1} parent=31 // pred_check
          %p377 = pneg %p97
        $region72: #{bi_aggregator.1} parent=31 // pred_check_branch
          %379 = sbr.rel (%p377) target = $region74
        $region73: #{bi_aggregator.1} parent=31 // pred_region
          %s380 = smul.u32 %s32, 4
          %s381 = sadd.s32 %s380, %s33
          %s382 = sld [smem:[#allocation4 + %s381]]
          %s383 = smul.u32 16, %s382
          %p384 = scmp.lt.s32.totalorder %s383, 63
          %s385 = scalar_select %p384, %s383, 63
          %s386 = smul.addr %s385, 8
          %s387 = scalar_lea.vmem %s3, %s386
          %s388 = smul.u32 %s32, 4
          %s389 = sadd.s32 %s388, %s33
          %s390 = sld [smem:[#allocation4 + %s389]]
          %s391 = smul.u32 16, %s390
        $region74: #{bi_aggregator.1} parent=31 // pred_fallthru
          _
        // Predicated region
        $region75: #{bi_aggregator.1} parent=31 // pred_check
          %p392 = pneg %p123
        $region76: #{bi_aggregator.1} parent=31 // pred_check_branch
          %394 = sbr.rel (%p392) target = $region78
        $region77: #{bi_aggregator.1} parent=31 // pred_region
          %s395 = smul.u32 16, %s32
          %p396 = scmp.lt.s32.totalorder %s395, 63
          %s397 = scalar_select %p396, %s395, 63
          %s398 = smul.addr %s397, 8
          %s399 = scalar_lea.vmem %s4, %s398
          %s400 = smul.u32 16, %s32
        $region78: #{bi_aggregator.1} parent=31 // pred_fallthru
          _
      $region32: #{bi_aggregator.1} parent=5 // pred_fallthru
        _
      %p401 = scmp.le.s32.totalorder 1, %s25
      %p402 = scmp.lt.s32.totalorder %s25, 17
      %p403 = pnand %p401, %p402
      %p404 = pneg %p403
      // Predicated region
      $region79: #{bi_aggregator.1} parent=5 // pred_check
        _
      $region80: #{bi_aggregator.1} parent=5 // pred_check_branch
        %406 = sbr.rel (%p403) target = $region82
      $region81: #{bi_aggregator.1} parent=5 // pred_region
        %s407 = ssub.s32 %s25, 1
        %s408 = sand.u32 %s58, 1
        %s409 = sand.u32 %s58, 1
        %s410 = smul.addr %s409, 128
        %s411 = scalar_lea.vmem [#allocation6], %s410
        // Predicated region
        $region83: #{bi_aggregator.1} parent=81 // pred_check
          %p412 = pneg %p71
        $region84: #{bi_aggregator.1} parent=81 // pred_check_branch
          %414 = sbr.rel (%p412) target = $region86
        $region85: #{bi_aggregator.1} parent=81 // pred_region
          _
        $region86: #{bi_aggregator.1} parent=81 // pred_fallthru
          _
        %s415 = sand.u32 %s58, 1
        %s416 = sand.u32 %s58, 1
        %s417 = smul.addr %s416, 128
        %s418 = scalar_lea.vmem [#allocation6], %s417
        %p419 = pneg %p71
        %p420 = pneg %p68
        %s421 = smul.u32 %s34, 4
        %s422 = sadd.s32 %s421, %s35
        %s423 = sld [smem:[#allocation4 + %s422]]
        %s424 = smul.u32 16, %s423
        %p425 = scmp.lt.s32.totalorder %s424, 63
        %s426 = scalar_select %p425, %s424, 63
        %s427 = smul.addr %s426, 8
        %s428 = scalar_lea.vmem %s3, %s427
        %p429 = pneg %p103
        %p430 = pneg %p100
        %s431 = smul.u32 16, %s34
        %p432 = scmp.lt.s32.totalorder %s431, 63
        %s433 = scalar_select %p432, %s431, 63
        %s434 = smul.addr %s433, 8
        %s435 = scalar_lea.vmem %s4, %s434
        %p436 = pneg %p129
        %p437 = pneg %p126
        %p438 = pneg %p150
        %p439 = pneg %p147
        %p440 = pneg %p171
        %p441 = pneg %p168
        %p442 = pneg %p192
        %p443 = pneg %p189
        %p444 = pneg %p213
        %p445 = pneg %p210
        %p446 = pneg %p239
        %p447 = pneg %p236
        %s448 = smul.u32 16, %s34
        %p449 = scmp.lt.s32.totalorder %s448, 63
        %s450 = scalar_select %p449, %s448, 63
        %s451 = smul.addr %s450, 8
        %s452 = scalar_lea.vmem %s9, %s451
        %s453 = smul.u32 %s34, 4
        %s454 = sadd.s32 %s453, %s35
        %s455 = sld [smem:[#allocation4 + %s454]]
        %s456 = smul.u32 16, %s34
        %s457 = smul.u32 %s34, 4
        %s458 = sadd.s32 %s457, %s35
        %s459 = sld [smem:[#allocation4 + %s458]]
        %s460 = smul.u32 16, %s459
        %p461 = scmp.lt.s32.totalorder %s460, 63
        %s462 = scalar_select %p461, %s460, 63
        %s463 = smul.addr %s462, 8
        %s464 = scalar_lea.vmem %s3, %s463
        %s465 = smul.u32 %s34, 4
        %s466 = sadd.s32 %s465, %s35
        %s467 = sld [smem:[#allocation4 + %s466]]
        %s468 = smul.u32 16, %s467
        %s469 = smul.u32 16, %s34
        %p470 = scmp.lt.s32.totalorder %s469, 63
        %s471 = scalar_select %p470, %s469, 63
        %s472 = smul.addr %s471, 8
        %s473 = scalar_lea.vmem %s4, %s472
        %s474 = smul.u32 16, %s34
        %s475 = smul.u32 16, %s34
        %p476 = scmp.lt.s32.totalorder %s475, 63
        %s477 = scalar_select %p476, %s475, 63
        %s478 = smul.addr %s477, 8
        %s479 = scalar_lea.vmem %s9, %s478
        %s480 = smul.u32 16, %s34
        %p481 = scmp.eq.s32.totalorder %s35, 0
        // Predicated region
        $region87: #{bi_aggregator.1} parent=81 // pred_check
          %p482 = pneg %p481
        $region88: #{bi_aggregator.1} parent=81 // pred_check_branch
          %484 = sbr.rel (%p482) target = $region90
        $region89: #{bi_aggregator.1} parent=81 // pred_region
          %485 = vst [vmem:[#allocation2] sm:$0xff] 0.0
          %486 = vst [vmem:[#allocation2 + $0x8] sm:$0xff] 0.0
          %487 = vst [vmem:[#allocation2 + $0x10] sm:$0xff] 0.0
          %488 = vst [vmem:[#allocation2 + $0x18] sm:$0xff] 0.0
          %489 = vst [vmem:[#allocation2 + $0x20] sm:$0xff] 0.0
          %490 = vst [vmem:[#allocation2 + $0x28] sm:$0xff] 0.0
          %491 = vst [vmem:[#allocation2 + $0x30] sm:$0xff] 0.0
          %492 = vst [vmem:[#allocation2 + $0x38] sm:$0xff] 0.0
          %493 = vst [vmem:[#allocation2 + $0x40] sm:$0xff] 0.0
          %494 = vst [vmem:[#allocation2 + $0x48] sm:$0xff] 0.0
          %495 = vst [vmem:[#allocation2 + $0x50] sm:$0xff] 0.0
          %496 = vst [vmem:[#allocation2 + $0x58] sm:$0xff] 0.0
          %497 = vst [vmem:[#allocation2 + $0x60] sm:$0xff] 0.0
          %498 = vst [vmem:[#allocation2 + $0x68] sm:$0xff] 0.0
          %499 = vst [vmem:[#allocation2 + $0x70] sm:$0xff] 0.0
          %500 = vst [vmem:[#allocation2 + $0x78] sm:$0xff] 0.0
        $region90: #{bi_aggregator.1} parent=81 // pred_fallthru
          _
        %s501 = sld [smem:[#allocation5 + %s34]]
        %p502 = scmp.lt.s32.totalorder %s35, %s501
        // Predicated region
        $region91: #{bi_aggregator.1} parent=81 // pred_check
          %p503 = pneg %p502
        $region92: #{bi_aggregator.1} parent=81 // pred_check_branch
          %505 = sbr.rel (%p503) target = $region94
        $region93: #{bi_aggregator.1} parent=81 // pred_region
          %v506 = vld [vmem:[#allocation2] sm:$0xff]
          %v507 = vld [vmem:[#allocation2 + $0x8] sm:$0xff]
          %v508 = vld [vmem:[#allocation2 + $0x10] sm:$0xff]
          %v509 = vld [vmem:[#allocation2 + $0x18] sm:$0xff]
          %v510 = vld [vmem:[#allocation2 + $0x20] sm:$0xff]
          %v511 = vld [vmem:[#allocation2 + $0x28] sm:$0xff]
          %v512 = vld [vmem:[#allocation2 + $0x30] sm:$0xff]
          %v513 = vld [vmem:[#allocation2 + $0x38] sm:$0xff]
          %v514 = vld [vmem:[#allocation2 + $0x40] sm:$0xff]
          %v515 = vld [vmem:[#allocation2 + $0x48] sm:$0xff]
          %v516 = vld [vmem:[#allocation2 + $0x50] sm:$0xff]
          %v517 = vld [vmem:[#allocation2 + $0x58] sm:$0xff]
          %v518 = vld [vmem:[#allocation2 + $0x60] sm:$0xff]
          %v519 = vld [vmem:[#allocation2 + $0x68] sm:$0xff]
          %v520 = vld [vmem:[#allocation2 + $0x70] sm:$0xff]
          %v521 = vld [vmem:[#allocation2 + $0x78] sm:$0xff]
          %v522 = vld [vmem:[%s411] sm:$0xff]
          %v523 = vld [vmem:[%s411 + $0x8] sm:$0xff]
          %v524 = vld [vmem:[%s411 + $0x10] sm:$0xff]
          %v525 = vld [vmem:[%s411 + $0x18] sm:$0xff]
          %v526 = vld [vmem:[%s411 + $0x20] sm:$0xff]
          %v527 = vld [vmem:[%s411 + $0x28] sm:$0xff]
          %v528 = vld [vmem:[%s411 + $0x30] sm:$0xff]
          %v529 = vld [vmem:[%s411 + $0x38] sm:$0xff]
          %v530 = vld [vmem:[%s411 + $0x40] sm:$0xff]
          %v531 = vld [vmem:[%s411 + $0x48] sm:$0xff]
          %v532 = vld [vmem:[%s411 + $0x50] sm:$0xff]
          %v533 = vld [vmem:[%s411 + $0x58] sm:$0xff]
          %v534 = vld [vmem:[%s411 + $0x60] sm:$0xff]
          %v535 = vld [vmem:[%s411 + $0x68] sm:$0xff]
          %v536 = vld [vmem:[%s411 + $0x70] sm:$0xff]
          %v537 = vld [vmem:[%s411 + $0x78] sm:$0xff]
          %v538 = vld [vmem:[%s464] sm:$0xff]
          %v539 = vld [vmem:[%s464 + $0x8] sm:$0xff]
          %v540 = vld [vmem:[%s464 + $0x10] sm:$0xff]
          %v541 = vld [vmem:[%s464 + $0x18] sm:$0xff]
          %v542 = vld [vmem:[%s464 + $0x20] sm:$0xff]
          %v543 = vld [vmem:[%s464 + $0x28] sm:$0xff]
          %v544 = vld [vmem:[%s464 + $0x30] sm:$0xff]
          %v545 = vld [vmem:[%s464 + $0x38] sm:$0xff]
          %v546 = vld [vmem:[%s464 + $0x40] sm:$0xff]
          %v547 = vld [vmem:[%s464 + $0x48] sm:$0xff]
          %v548 = vld [vmem:[%s464 + $0x50] sm:$0xff]
          %v549 = vld [vmem:[%s464 + $0x58] sm:$0xff]
          %v550 = vld [vmem:[%s464 + $0x60] sm:$0xff]
          %v551 = vld [vmem:[%s464 + $0x68] sm:$0xff]
          %v552 = vld [vmem:[%s464 + $0x70] sm:$0xff]
          %v553 = vld [vmem:[%s464 + $0x78] sm:$0xff]
          %554 = vmatprep.subr.mxu0 0.0
          %555 = vmatpush1.msra.mxu0 %v538
          %556 = vmatprep.subr.mxu0 0.0
          %557 = vmatpush1.msra.mxu0 %v539
          %558 = vmatprep.subr.mxu0 0.0
          %559 = vmatpush1.msra.mxu0 %v540
          %560 = vmatprep.subr.mxu0 0.0
          %561 = vmatpush1.msra.mxu0 %v541
          %562 = vmatprep.subr.mxu0 0.0
          %563 = vmatpush1.msra.mxu0 %v542
          %564 = vmatprep.subr.mxu0 0.0
          %565 = vmatpush1.msra.mxu0 %v543
          %566 = vmatprep.subr.mxu0 0.0
          %567 = vmatpush1.msra.mxu0 %v544
          %568 = vmatprep.subr.mxu0 0.0
          %569 = vmatpush1.msra.mxu0 %v545
          %570 = vmatprep.subr.mxu0 0.0
          %571 = vmatpush1.msra.mxu0 %v546
          %572 = vmatprep.subr.mxu0 0.0
          %573 = vmatpush1.msra.mxu0 %v547
          %574 = vmatprep.subr.mxu0 0.0
          %575 = vmatpush1.msra.mxu0 %v548
          %576 = vmatprep.subr.mxu0 0.0
          %577 = vmatpush1.msra.mxu0 %v549
          %578 = vmatprep.subr.mxu0 0.0
          %579 = vmatpush1.msra.mxu0 %v550
          %580 = vmatprep.subr.mxu0 0.0
          %581 = vmatpush1.msra.mxu0 %v551
          %582 = vmatprep.subr.mxu0 0.0
          %583 = vmatpush1.msra.mxu0 %v552
          %584 = vmatprep.subr.mxu0 0.0
          %585 = vmatpush1.msra.mxu0 %v553
          %586 = vmatprep.subr.mxu0 0.0
          %587 = vmatpush1.msra.mxu0 0.0
          %588 = vmatprep.subr.mxu0 0.0
          %589 = vmatpush1.msra.mxu0 0.0
          %590 = vmatprep.subr.mxu0 0.0
          %591 = vmatpush1.msra.mxu0 0.0
          %592 = vmatprep.subr.mxu0 0.0
          %593 = vmatpush1.msra.mxu0 0.0
          %594 = vmatprep.subr.mxu0 0.0
          %595 = vmatpush1.msra.mxu0 0.0
          %596 = vmatprep.subr.mxu0 0.0
          %597 = vmatpush1.msra.mxu0 0.0
          %598 = vmatprep.subr.mxu0 0.0
          %599 = vmatpush1.msra.mxu0 0.0
          %600 = vmatprep.subr.mxu0 0.0
          %601 = vmatpush1.msra.mxu0 0.0
          %602 = vmatprep.subr.mxu0 0.0
          %603 = vmatpush1.msra.mxu0 0.0
          %604 = vmatprep.subr.mxu0 0.0
          %605 = vmatpush1.msra.mxu0 0.0
          %606 = vmatprep.subr.mxu0 0.0
          %607 = vmatpush1.msra.mxu0 0.0
          %608 = vmatprep.subr.mxu0 0.0
          %609 = vmatpush1.msra.mxu0 0.0
          %610 = vmatprep.subr.mxu0 0.0
          %611 = vmatpush1.msra.mxu0 0.0
          %612 = vmatprep.subr.mxu0 0.0
          %613 = vmatpush1.msra.mxu0 0.0
          %614 = vmatprep.subr.mxu0 0.0
          %615 = vmatpush1.msra.mxu0 0.0
          %616 = vmatprep.subr.mxu0 0.0
          %617 = vmatpush1.msra.mxu0 0.0
          %618 = vmatprep.mubr.f32.mxu0 0.0
          %619 = vmatmul.mubr.f32.gmra.mrb[0].mxu0 %v522
          %v620 = vpop.f32.mrb[0].mxu0
          %v621 = vadd.f32 0.0, %v620
          %v622 = vpop.f32.mrb[0].mxu0
          %623 = vmatprep.mubr.f32.mxu0 0.0
          %624 = vmatmul.mubr.f32.gmra.mrb[0].mxu0 %v523
          %v625 = vpop.f32.mrb[0].mxu0
          %v626 = vadd.f32 0.0, %v625
          %v627 = vpop.f32.mrb[0].mxu0
          %628 = vmatprep.mubr.f32.mxu0 0.0
          %629 = vmatmul.mubr.f32.gmra.mrb[0].mxu0 %v524
          %v630 = vpop.f32.mrb[0].mxu0
          %v631 = vadd.f32 0.0, %v630
          %v632 = vpop.f32.mrb[0].mxu0
          %633 = vmatprep.mubr.f32.mxu0 0.0
          %634 = vmatmul.mubr.f32.gmra.mrb[0].mxu0 %v525
          %v635 = vpop.f32.mrb[0].mxu0
          %v636 = vadd.f32 0.0, %v635
          %v637 = vpop.f32.mrb[0].mxu0
          %638 = vmatprep.mubr.f32.mxu0 0.0
          %639 = vmatmul.mubr.f32.gmra.mrb[0].mxu0 %v526
          %v640 = vpop.f32.mrb[0].mxu0
          %v641 = vadd.f32 0.0, %v640
          %v642 = vpop.f32.mrb[0].mxu0
          %643 = vmatprep.mubr.f32.mxu0 0.0
          %644 = vmatmul.mubr.f32.gmra.mrb[0].mxu0 %v527
          %v645 = vpop.f32.mrb[0].mxu0
          %v646 = vadd.f32 0.0, %v645
          %v647 = vpop.f32.mrb[0].mxu0
          %648 = vmatprep.mubr.f32.mxu0 0.0
          %649 = vmatmul.mubr.f32.gmra.mrb[0].mxu0 %v528
          %v650 = vpop.f32.mrb[0].mxu0
          %v651 = vadd.f32 0.0, %v650
          %v652 = vpop.f32.mrb[0].mxu0
          %653 = vmatprep.mubr.f32.mxu0 0.0
          %654 = vmatmul.mubr.f32.gmra.mrb[0].mxu0 %v529
          %v655 = vpop.f32.mrb[0].mxu0
          %v656 = vadd.f32 0.0, %v655
          %v657 = vpop.f32.mrb[0].mxu0
          %658 = vmatprep.mubr.f32.mxu0 0.0
          %659 = vmatmul.mubr.f32.gmra.mrb[0].mxu0 %v530
          %v660 = vpop.f32.mrb[0].mxu0
          %v661 = vadd.f32 0.0, %v660
          %v662 = vpop.f32.mrb[0].mxu0
          %663 = vmatprep.mubr.f32.mxu0 0.0
          %664 = vmatmul.mubr.f32.gmra.mrb[0].mxu0 %v531
          %v665 = vpop.f32.mrb[0].mxu0
          %v666 = vadd.f32 0.0, %v665
          %v667 = vpop.f32.mrb[0].mxu0
          %668 = vmatprep.mubr.f32.mxu0 0.0
          %669 = vmatmul.mubr.f32.gmra.mrb[0].mxu0 %v532
          %v670 = vpop.f32.mrb[0].mxu0
          %v671 = vadd.f32 0.0, %v670
          %v672 = vpop.f32.mrb[0].mxu0
          %673 = vmatprep.mubr.f32.mxu0 0.0
          %674 = vmatmul.mubr.f32.gmra.mrb[0].mxu0 %v533
          %v675 = vpop.f32.mrb[0].mxu0
          %v676 = vadd.f32 0.0, %v675
          %v677 = vpop.f32.mrb[0].mxu0
          %678 = vmatprep.mubr.f32.mxu0 0.0
          %679 = vmatmul.mubr.f32.gmra.mrb[0].mxu0 %v534
          %v680 = vpop.f32.mrb[0].mxu0
          %v681 = vadd.f32 0.0, %v680
          %v682 = vpop.f32.mrb[0].mxu0
          %683 = vmatprep.mubr.f32.mxu0 0.0
          %684 = vmatmul.mubr.f32.gmra.mrb[0].mxu0 %v535
          %v685 = vpop.f32.mrb[0].mxu0
          %v686 = vadd.f32 0.0, %v685
          %v687 = vpop.f32.mrb[0].mxu0
          %688 = vmatprep.mubr.f32.mxu0 0.0
          %689 = vmatmul.mubr.f32.gmra.mrb[0].mxu0 %v536
          %v690 = vpop.f32.mrb[0].mxu0
          %v691 = vadd.f32 0.0, %v690
          %v692 = vpop.f32.mrb[0].mxu0
          %693 = vmatprep.mubr.f32.mxu0 0.0
          %694 = vmatmul.mubr.f32.gmra.mrb[0].mxu0 %v537
          %v695 = vpop.f32.mrb[0].mxu0
          %v696 = vadd.f32 0.0, %v695
          %v697 = vpop.f32.mrb[0].mxu0
          %698 = vdwg.mxu0
          %v699 = vadd.f32 %v506, %v621
          %v700 = vadd.f32 %v507, %v626
          %v701 = vadd.f32 %v508, %v631
          %v702 = vadd.f32 %v509, %v636
          %v703 = vadd.f32 %v510, %v641
          %v704 = vadd.f32 %v511, %v646
          %v705 = vadd.f32 %v512, %v651
          %v706 = vadd.f32 %v513, %v656
          %v707 = vadd.f32 %v514, %v661
          %v708 = vadd.f32 %v515, %v666
          %v709 = vadd.f32 %v516, %v671
          %v710 = vadd.f32 %v517, %v676
          %v711 = vadd.f32 %v518, %v681
          %v712 = vadd.f32 %v519, %v686
          %v713 = vadd.f32 %v520, %v691
          %v714 = vadd.f32 %v521, %v696
          %715 = vst [vmem:[#allocation2] sm:$0xff] %v699
          %716 = vst [vmem:[#allocation2 + $0x8] sm:$0xff] %v700
          %717 = vst [vmem:[#allocation2 + $0x10] sm:$0xff] %v701
          %718 = vst [vmem:[#allocation2 + $0x18] sm:$0xff] %v702
          %719 = vst [vmem:[#allocation2 + $0x20] sm:$0xff] %v703
          %720 = vst [vmem:[#allocation2 + $0x28] sm:$0xff] %v704
          %721 = vst [vmem:[#allocation2 + $0x30] sm:$0xff] %v705
          %722 = vst [vmem:[#allocation2 + $0x38] sm:$0xff] %v706
          %723 = vst [vmem:[#allocation2 + $0x40] sm:$0xff] %v707
          %724 = vst [vmem:[#allocation2 + $0x48] sm:$0xff] %v708
          %725 = vst [vmem:[#allocation2 + $0x50] sm:$0xff] %v709
          %726 = vst [vmem:[#allocation2 + $0x58] sm:$0xff] %v710
          %727 = vst [vmem:[#allocation2 + $0x60] sm:$0xff] %v711
          %728 = vst [vmem:[#allocation2 + $0x68] sm:$0xff] %v712
          %729 = vst [vmem:[#allocation2 + $0x70] sm:$0xff] %v713
          %730 = vst [vmem:[#allocation2 + $0x78] sm:$0xff] %v714
        $region94: #{bi_aggregator.1} parent=81 // pred_fallthru
          _
        %p731 = scmp.eq.s32.totalorder %s35, 3
        // Predicated region
        $region95: #{bi_aggregator.1} parent=81 // pred_check
          %p732 = pneg %p731
        $region96: #{bi_aggregator.1} parent=81 // pred_check_branch
          %734 = sbr.rel (%p732) target = $region98
        $region97: #{bi_aggregator.1} parent=81 // pred_region
          %v735 = vld [vmem:[#allocation2] sm:$0xff]
          %v736 = vld [vmem:[#allocation2 + $0x8] sm:$0xff]
          %v737 = vld [vmem:[#allocation2 + $0x10] sm:$0xff]
          %v738 = vld [vmem:[#allocation2 + $0x18] sm:$0xff]
          %v739 = vld [vmem:[#allocation2 + $0x20] sm:$0xff]
          %v740 = vld [vmem:[#allocation2 + $0x28] sm:$0xff]
          %v741 = vld [vmem:[#allocation2 + $0x30] sm:$0xff]
          %v742 = vld [vmem:[#allocation2 + $0x38] sm:$0xff]
          %v743 = vld [vmem:[#allocation2 + $0x40] sm:$0xff]
          %v744 = vld [vmem:[#allocation2 + $0x48] sm:$0xff]
          %v745 = vld [vmem:[#allocation2 + $0x50] sm:$0xff]
          %v746 = vld [vmem:[#allocation2 + $0x58] sm:$0xff]
          %v747 = vld [vmem:[#allocation2 + $0x60] sm:$0xff]
          %v748 = vld [vmem:[#allocation2 + $0x68] sm:$0xff]
          %v749 = vld [vmem:[#allocation2 + $0x70] sm:$0xff]
          %v750 = vld [vmem:[#allocation2 + $0x78] sm:$0xff]
          %v751 = vld [vmem:[%s473] sm:$0xff]
          %v752 = vld [vmem:[%s473 + $0x8] sm:$0xff]
          %v753 = vld [vmem:[%s473 + $0x10] sm:$0xff]
          %v754 = vld [vmem:[%s473 + $0x18] sm:$0xff]
          %v755 = vld [vmem:[%s473 + $0x20] sm:$0xff]
          %v756 = vld [vmem:[%s473 + $0x28] sm:$0xff]
          %v757 = vld [vmem:[%s473 + $0x30] sm:$0xff]
          %v758 = vld [vmem:[%s473 + $0x38] sm:$0xff]
          %v759 = vld [vmem:[%s473 + $0x40] sm:$0xff]
          %v760 = vld [vmem:[%s473 + $0x48] sm:$0xff]
          %v761 = vld [vmem:[%s473 + $0x50] sm:$0xff]
          %v762 = vld [vmem:[%s473 + $0x58] sm:$0xff]
          %v763 = vld [vmem:[%s473 + $0x60] sm:$0xff]
          %v764 = vld [vmem:[%s473 + $0x68] sm:$0xff]
          %v765 = vld [vmem:[%s473 + $0x70] sm:$0xff]
          %v766 = vld [vmem:[%s473 + $0x78] sm:$0xff]
          %v767 = vadd.f32 %v751, %v735
          %v768 = vadd.f32 %v752, %v736
          %v769 = vadd.f32 %v753, %v737
          %v770 = vadd.f32 %v754, %v738
          %v771 = vadd.f32 %v755, %v739
          %v772 = vadd.f32 %v756, %v740
          %v773 = vadd.f32 %v757, %v741
          %v774 = vadd.f32 %v758, %v742
          %v775 = vadd.f32 %v759, %v743
          %v776 = vadd.f32 %v760, %v744
          %v777 = vadd.f32 %v761, %v745
          %v778 = vadd.f32 %v762, %v746
          %v779 = vadd.f32 %v763, %v747
          %v780 = vadd.f32 %v764, %v748
          %v781 = vadd.f32 %v765, %v749
          %v782 = vadd.f32 %v766, %v750
          %v783 = vld [vmem:[%s5] sm:$0xff]
          %v784 = vld [vmem:[%s5 + $0x8] sm:$0xff]
          %v785 = vld [vmem:[%s5 + $0x10] sm:$0xff]
          %v786 = vld [vmem:[%s5 + $0x18] sm:$0xff]
          %v787 = vld [vmem:[%s5 + $0x20] sm:$0xff]
          %v788 = vld [vmem:[%s5 + $0x28] sm:$0xff]
          %v789 = vld [vmem:[%s5 + $0x30] sm:$0xff]
          %v790 = vld [vmem:[%s5 + $0x38] sm:$0xff]
          %v791 = vld [vmem:[%s5 + $0x40] sm:$0xff]
          %v792 = vld [vmem:[%s5 + $0x48] sm:$0xff]
          %v793 = vld [vmem:[%s5 + $0x50] sm:$0xff]
          %v794 = vld [vmem:[%s5 + $0x58] sm:$0xff]
          %v795 = vld [vmem:[%s5 + $0x60] sm:$0xff]
          %v796 = vld [vmem:[%s5 + $0x68] sm:$0xff]
          %v797 = vld [vmem:[%s5 + $0x70] sm:$0xff]
          %v798 = vld [vmem:[%s5 + $0x78] sm:$0xff]
          %v799 = vld [vmem:[%s6] sm:$0x1]
          %v801 = vlaneseq
          %v802 = vshrl.u32 %v801, 7
          %v803 = vsub.s32 0, %v802
          %v804 = vrot.slane %v799, %v803
          %806 = vmatprep.subr.mxu0 0.0
          %807 = vmatpush1.msra.mxu0 %v783
          %808 = vmatprep.subr.mxu0 0.0
          %809 = vmatpush1.msra.mxu0 %v784
          %810 = vmatprep.subr.mxu0 0.0
          %811 = vmatpush1.msra.mxu0 %v785
          %812 = vmatprep.subr.mxu0 0.0
          %813 = vmatpush1.msra.mxu0 %v786
          %814 = vmatprep.subr.mxu0 0.0
          %815 = vmatpush1.msra.mxu0 %v787
          %816 = vmatprep.subr.mxu0 0.0
          %817 = vmatpush1.msra.mxu0 %v788
          %818 = vmatprep.subr.mxu0 0.0
          %819 = vmatpush1.msra.mxu0 %v789
          %820 = vmatprep.subr.mxu0 0.0
          %821 = vmatpush1.msra.mxu0 %v790
          %822 = vmatprep.subr.mxu0 0.0
          %823 = vmatpush1.msra.mxu0 %v791
          %824 = vmatprep.subr.mxu0 0.0
          %825 = vmatpush1.msra.mxu0 %v792
          %826 = vmatprep.subr.mxu0 0.0
          %827 = vmatpush1.msra.mxu0 %v793
          %828 = vmatprep.subr.mxu0 0.0
          %829 = vmatpush1.msra.mxu0 %v794
          %830 = vmatprep.subr.mxu0 0.0
          %831 = vmatpush1.msra.mxu0 %v795
          %832 = vmatprep.subr.mxu0 0.0
          %833 = vmatpush1.msra.mxu0 %v796
          %834 = vmatprep.subr.mxu0 0.0
          %835 = vmatpush1.msra.mxu0 %v797
          %836 = vmatprep.subr.mxu0 0.0
          %837 = vmatpush1.msra.mxu0 %v798
          %838 = vmatprep.subr.mxu0 0.0
          %839 = vmatpush1.msra.mxu0 0.0
          %840 = vmatprep.subr.mxu0 0.0
          %841 = vmatpush1.msra.mxu0 0.0
          %842 = vmatprep.subr.mxu0 0.0
          %843 = vmatpush1.msra.mxu0 0.0
          %844 = vmatprep.subr.mxu0 0.0
          %845 = vmatpush1.msra.mxu0 0.0
          %846 = vmatprep.subr.mxu0 0.0
          %847 = vmatpush1.msra.mxu0 0.0
          %848 = vmatprep.subr.mxu0 0.0
          %849 = vmatpush1.msra.mxu0 0.0
          %850 = vmatprep.subr.mxu0 0.0
          %851 = vmatpush1.msra.mxu0 0.0
          %852 = vmatprep.subr.mxu0 0.0
          %853 = vmatpush1.msra.mxu0 0.0
          %854 = vmatprep.subr.mxu0 0.0
          %855 = vmatpush1.msra.mxu0 0.0
          %856 = vmatprep.subr.mxu0 0.0
          %857 = vmatpush1.msra.mxu0 0.0
          %858 = vmatprep.subr.mxu0 0.0
          %859 = vmatpush1.msra.mxu0 0.0
          %860 = vmatprep.subr.mxu0 0.0
          %861 = vmatpush1.msra.mxu0 0.0
          %862 = vmatprep.subr.mxu0 0.0
          %863 = vmatpush1.msra.mxu0 0.0
          %864 = vmatprep.subr.mxu0 0.0
          %865 = vmatpush1.msra.mxu0 0.0
          %866 = vmatprep.subr.mxu0 0.0
          %867 = vmatpush1.msra.mxu0 0.0
          %868 = vmatprep.subr.mxu0 0.0
          %869 = vmatpush1.msra.mxu0 0.0
          %870 = vmatprep.mubr.f32.mxu0 0.0
          %871 = vmatmul.mubr.f32.gmra.mrb[0].mxu0 %v767
          %v872 = vpop.f32.mrb[0].mxu0
          %v873 = vadd.f32 %v804, %v872
          %v874 = vpop.f32.mrb[0].mxu0
          %875 = vmatprep.mubr.f32.mxu0 0.0
          %876 = vmatmul.mubr.f32.gmra.mrb[0].mxu0 %v768
          %v877 = vpop.f32.mrb[0].mxu0
          %v878 = vadd.f32 %v804, %v877
          %v879 = vpop.f32.mrb[0].mxu0
          %880 = vmatprep.mubr.f32.mxu0 0.0
          %881 = vmatmul.mubr.f32.gmra.mrb[0].mxu0 %v769
          %v882 = vpop.f32.mrb[0].mxu0
          %v883 = vadd.f32 %v804, %v882
          %v884 = vpop.f32.mrb[0].mxu0
          %885 = vmatprep.mubr.f32.mxu0 0.0
          %886 = vmatmul.mubr.f32.gmra.mrb[0].mxu0 %v770
          %v887 = vpop.f32.mrb[0].mxu0
          %v888 = vadd.f32 %v804, %v887
          %v889 = vpop.f32.mrb[0].mxu0
          %890 = vmatprep.mubr.f32.mxu0 0.0
          %891 = vmatmul.mubr.f32.gmra.mrb[0].mxu0 %v771
          %v892 = vpop.f32.mrb[0].mxu0
          %v893 = vadd.f32 %v804, %v892
          %v894 = vpop.f32.mrb[0].mxu0
          %895 = vmatprep.mubr.f32.mxu0 0.0
          %896 = vmatmul.mubr.f32.gmra.mrb[0].mxu0 %v772
          %v897 = vpop.f32.mrb[0].mxu0
          %v898 = vadd.f32 %v804, %v897
          %v899 = vpop.f32.mrb[0].mxu0
          %900 = vmatprep.mubr.f32.mxu0 0.0
          %901 = vmatmul.mubr.f32.gmra.mrb[0].mxu0 %v773
          %v902 = vpop.f32.mrb[0].mxu0
          %v903 = vadd.f32 %v804, %v902
          %v904 = vpop.f32.mrb[0].mxu0
          %905 = vmatprep.mubr.f32.mxu0 0.0
          %906 = vmatmul.mubr.f32.gmra.mrb[0].mxu0 %v774
          %v907 = vpop.f32.mrb[0].mxu0
          %v908 = vadd.f32 %v804, %v907
          %v909 = vpop.f32.mrb[0].mxu0
          %910 = vmatprep.mubr.f32.mxu0 0.0
          %911 = vmatmul.mubr.f32.gmra.mrb[0].mxu0 %v775
          %v912 = vpop.f32.mrb[0].mxu0
          %v913 = vadd.f32 %v804, %v912
          %v914 = vpop.f32.mrb[0].mxu0
          %915 = vmatprep.mubr.f32.mxu0 0.0
          %916 = vmatmul.mubr.f32.gmra.mrb[0].mxu0 %v776
          %v917 = vpop.f32.mrb[0].mxu0
          %v918 = vadd.f32 %v804, %v917
          %v919 = vpop.f32.mrb[0].mxu0
          %920 = vmatprep.mubr.f32.mxu0 0.0
          %921 = vmatmul.mubr.f32.gmra.mrb[0].mxu0 %v777
          %v922 = vpop.f32.mrb[0].mxu0
          %v923 = vadd.f32 %v804, %v922
          %v924 = vpop.f32.mrb[0].mxu0
          %925 = vmatprep.mubr.f32.mxu0 0.0
          %926 = vmatmul.mubr.f32.gmra.mrb[0].mxu0 %v778
          %v927 = vpop.f32.mrb[0].mxu0
          %v928 = vadd.f32 %v804, %v927
          %v929 = vpop.f32.mrb[0].mxu0
          %930 = vmatprep.mubr.f32.mxu0 0.0
          %931 = vmatmul.mubr.f32.gmra.mrb[0].mxu0 %v779
          %v932 = vpop.f32.mrb[0].mxu0
          %v933 = vadd.f32 %v804, %v932
          %v934 = vpop.f32.mrb[0].mxu0
          %935 = vmatprep.mubr.f32.mxu0 0.0
          %936 = vmatmul.mubr.f32.gmra.mrb[0].mxu0 %v780
          %v937 = vpop.f32.mrb[0].mxu0
          %v938 = vadd.f32 %v804, %v937
          %v939 = vpop.f32.mrb[0].mxu0
          %940 = vmatprep.mubr.f32.mxu0 0.0
          %941 = vmatmul.mubr.f32.gmra.mrb[0].mxu0 %v781
          %v942 = vpop.f32.mrb[0].mxu0
          %v943 = vadd.f32 %v804, %v942
          %v944 = vpop.f32.mrb[0].mxu0
          %945 = vmatprep.mubr.f32.mxu0 0.0
          %946 = vmatmul.mubr.f32.gmra.mrb[0].mxu0 %v782
          %v947 = vpop.f32.mrb[0].mxu0
          %v948 = vadd.f32 %v804, %v947
          %v949 = vpop.f32.mrb[0].mxu0
          %950 = vdwg.mxu0
          %vm951 = vcmp.ge.f32.partialorder %v873, 0.0
          %vm952 = vcmp.ge.f32.partialorder %v878, 0.0
          %vm953 = vcmp.ge.f32.partialorder %v883, 0.0
          %vm954 = vcmp.ge.f32.partialorder %v888, 0.0
          %vm955 = vcmp.ge.f32.partialorder %v893, 0.0
          %vm956 = vcmp.ge.f32.partialorder %v898, 0.0
          %vm957 = vcmp.ge.f32.partialorder %v903, 0.0
          %vm958 = vcmp.ge.f32.partialorder %v908, 0.0
          %vm959 = vcmp.ge.f32.partialorder %v913, 0.0
          %vm960 = vcmp.ge.f32.partialorder %v918, 0.0
          %vm961 = vcmp.ge.f32.partialorder %v923, 0.0
          %vm962 = vcmp.ge.f32.partialorder %v928, 0.0
          %vm963 = vcmp.ge.f32.partialorder %v933, 0.0
          %vm964 = vcmp.ge.f32.partialorder %v938, 0.0
          %vm965 = vcmp.ge.f32.partialorder %v943, 0.0
          %vm966 = vcmp.ge.f32.partialorder %v948, 0.0
          %v967 = vmul.f32 %v873, 0.01
          %v968 = vmul.f32 %v878, 0.01
          %v969 = vmul.f32 %v883, 0.01
          %v970 = vmul.f32 %v888, 0.01
          %v971 = vmul.f32 %v893, 0.01
          %v972 = vmul.f32 %v898, 0.01
          %v973 = vmul.f32 %v903, 0.01
          %v974 = vmul.f32 %v908, 0.01
          %v975 = vmul.f32 %v913, 0.01
          %v976 = vmul.f32 %v918, 0.01
          %v977 = vmul.f32 %v923, 0.01
          %v978 = vmul.f32 %v928, 0.01
          %v979 = vmul.f32 %v933, 0.01
          %v980 = vmul.f32 %v938, 0.01
          %v981 = vmul.f32 %v943, 0.01
          %v982 = vmul.f32 %v948, 0.01
          %v983 = vsel %vm951, %v873, %v967
          %v984 = vsel %vm952, %v878, %v968
          %v985 = vsel %vm953, %v883, %v969
          %v986 = vsel %vm954, %v888, %v970
          %v987 = vsel %vm955, %v893, %v971
          %v988 = vsel %vm956, %v898, %v972
          %v989 = vsel %vm957, %v903, %v973
          %v990 = vsel %vm958, %v908, %v974
          %v991 = vsel %vm959, %v913, %v975
          %v992 = vsel %vm960, %v918, %v976
          %v993 = vsel %vm961, %v923, %v977
          %v994 = vsel %vm962, %v928, %v978
          %v995 = vsel %vm963, %v933, %v979
          %v996 = vsel %vm964, %v938, %v980
          %v997 = vsel %vm965, %v943, %v981
          %v998 = vsel %vm966, %v948, %v982
          %v999 = vmul.f32 %v751, %v735
          %v1000 = vmul.f32 %v752, %v736
          %v1001 = vmul.f32 %v753, %v737
          %v1002 = vmul.f32 %v754, %v738
          %v1003 = vmul.f32 %v755, %v739
          %v1004 = vmul.f32 %v756, %v740
          %v1005 = vmul.f32 %v757, %v741
          %v1006 = vmul.f32 %v758, %v742
          %v1007 = vmul.f32 %v759, %v743
          %v1008 = vmul.f32 %v760, %v744
          %v1009 = vmul.f32 %v761, %v745
          %v1010 = vmul.f32 %v762, %v746
          %v1011 = vmul.f32 %v763, %v747
          %v1012 = vmul.f32 %v764, %v748
          %v1013 = vmul.f32 %v765, %v749
          %v1014 = vmul.f32 %v766, %v750
          %v1015 = vld [vmem:[%s7] sm:$0xff]
          %v1016 = vld [vmem:[%s7 + $0x8] sm:$0xff]
          %v1017 = vld [vmem:[%s7 + $0x10] sm:$0xff]
          %v1018 = vld [vmem:[%s7 + $0x18] sm:$0xff]
          %v1019 = vld [vmem:[%s7 + $0x20] sm:$0xff]
          %v1020 = vld [vmem:[%s7 + $0x28] sm:$0xff]
          %v1021 = vld [vmem:[%s7 + $0x30] sm:$0xff]
          %v1022 = vld [vmem:[%s7 + $0x38] sm:$0xff]
          %v1023 = vld [vmem:[%s7 + $0x40] sm:$0xff]
          %v1024 = vld [vmem:[%s7 + $0x48] sm:$0xff]
          %v1025 = vld [vmem:[%s7 + $0x50] sm:$0xff]
          %v1026 = vld [vmem:[%s7 + $0x58] sm:$0xff]
          %v1027 = vld [vmem:[%s7 + $0x60] sm:$0xff]
          %v1028 = vld [vmem:[%s7 + $0x68] sm:$0xff]
          %v1029 = vld [vmem:[%s7 + $0x70] sm:$0xff]
          %v1030 = vld [vmem:[%s7 + $0x78] sm:$0xff]
          %v1031 = vld [vmem:[%s8] sm:$0x1]
          %v1033 = vlaneseq
          %v1034 = vshrl.u32 %v1033, 7
          %v1035 = vsub.s32 0, %v1034
          %v1036 = vrot.slane %v1031, %v1035
          %1038 = vmatprep.subr.mxu0 0.0
          %1039 = vmatpush1.msra.mxu0 %v1015
          %1040 = vmatprep.subr.mxu0 0.0
          %1041 = vmatpush1.msra.mxu0 %v1016
          %1042 = vmatprep.subr.mxu0 0.0
          %1043 = vmatpush1.msra.mxu0 %v1017
          %1044 = vmatprep.subr.mxu0 0.0
          %1045 = vmatpush1.msra.mxu0 %v1018
          %1046 = vmatprep.subr.mxu0 0.0
          %1047 = vmatpush1.msra.mxu0 %v1019
          %1048 = vmatprep.subr.mxu0 0.0
          %1049 = vmatpush1.msra.mxu0 %v1020
          %1050 = vmatprep.subr.mxu0 0.0
          %1051 = vmatpush1.msra.mxu0 %v1021
          %1052 = vmatprep.subr.mxu0 0.0
          %1053 = vmatpush1.msra.mxu0 %v1022
          %1054 = vmatprep.subr.mxu0 0.0
          %1055 = vmatpush1.msra.mxu0 %v1023
          %1056 = vmatprep.subr.mxu0 0.0
          %1057 = vmatpush1.msra.mxu0 %v1024
          %1058 = vmatprep.subr.mxu0 0.0
          %1059 = vmatpush1.msra.mxu0 %v1025
          %1060 = vmatprep.subr.mxu0 0.0
          %1061 = vmatpush1.msra.mxu0 %v1026
          %1062 = vmatprep.subr.mxu0 0.0
          %1063 = vmatpush1.msra.mxu0 %v1027
          %1064 = vmatprep.subr.mxu0 0.0
          %1065 = vmatpush1.msra.mxu0 %v1028
          %1066 = vmatprep.subr.mxu0 0.0
          %1067 = vmatpush1.msra.mxu0 %v1029
          %1068 = vmatprep.subr.mxu0 0.0
          %1069 = vmatpush1.msra.mxu0 %v1030
          %1070 = vmatprep.subr.mxu0 0.0
          %1071 = vmatpush1.msra.mxu0 0.0
          %1072 = vmatprep.subr.mxu0 0.0
          %1073 = vmatpush1.msra.mxu0 0.0
          %1074 = vmatprep.subr.mxu0 0.0
          %1075 = vmatpush1.msra.mxu0 0.0
          %1076 = vmatprep.subr.mxu0 0.0
          %1077 = vmatpush1.msra.mxu0 0.0
          %1078 = vmatprep.subr.mxu0 0.0
          %1079 = vmatpush1.msra.mxu0 0.0
          %1080 = vmatprep.subr.mxu0 0.0
          %1081 = vmatpush1.msra.mxu0 0.0
          %1082 = vmatprep.subr.mxu0 0.0
          %1083 = vmatpush1.msra.mxu0 0.0
          %1084 = vmatprep.subr.mxu0 0.0
          %1085 = vmatpush1.msra.mxu0 0.0
          %1086 = vmatprep.subr.mxu0 0.0
          %1087 = vmatpush1.msra.mxu0 0.0
          %1088 = vmatprep.subr.mxu0 0.0
          %1089 = vmatpush1.msra.mxu0 0.0
          %1090 = vmatprep.subr.mxu0 0.0
          %1091 = vmatpush1.msra.mxu0 0.0
          %1092 = vmatprep.subr.mxu0 0.0
          %1093 = vmatpush1.msra.mxu0 0.0
          %1094 = vmatprep.subr.mxu0 0.0
          %1095 = vmatpush1.msra.mxu0 0.0
          %1096 = vmatprep.subr.mxu0 0.0
          %1097 = vmatpush1.msra.mxu0 0.0
          %1098 = vmatprep.subr.mxu0 0.0
          %1099 = vmatpush1.msra.mxu0 0.0
          %1100 = vmatprep.subr.mxu0 0.0
          %1101 = vmatpush1.msra.mxu0 0.0
          %1102 = vmatprep.mubr.f32.mxu0 0.0
          %1103 = vmatmul.mubr.f32.gmra.mrb[0].mxu0 %v999
          %v1104 = vpop.f32.mrb[0].mxu0
          %v1105 = vadd.f32 %v1036, %v1104
          %v1106 = vpop.f32.mrb[0].mxu0
          %1107 = vmatprep.mubr.f32.mxu0 0.0
          %1108 = vmatmul.mubr.f32.gmra.mrb[0].mxu0 %v1000
          %v1109 = vpop.f32.mrb[0].mxu0
          %v1110 = vadd.f32 %v1036, %v1109
          %v1111 = vpop.f32.mrb[0].mxu0
          %1112 = vmatprep.mubr.f32.mxu0 0.0
          %1113 = vmatmul.mubr.f32.gmra.mrb[0].mxu0 %v1001
          %v1114 = vpop.f32.mrb[0].mxu0
          %v1115 = vadd.f32 %v1036, %v1114
          %v1116 = vpop.f32.mrb[0].mxu0
          %1117 = vmatprep.mubr.f32.mxu0 0.0
          %1118 = vmatmul.mubr.f32.gmra.mrb[0].mxu0 %v1002
          %v1119 = vpop.f32.mrb[0].mxu0
          %v1120 = vadd.f32 %v1036, %v1119
          %v1121 = vpop.f32.mrb[0].mxu0
          %1122 = vmatprep.mubr.f32.mxu0 0.0
          %1123 = vmatmul.mubr.f32.gmra.mrb[0].mxu0 %v1003
          %v1124 = vpop.f32.mrb[0].mxu0
          %v1125 = vadd.f32 %v1036, %v1124
          %v1126 = vpop.f32.mrb[0].mxu0
          %1127 = vmatprep.mubr.f32.mxu0 0.0
          %1128 = vmatmul.mubr.f32.gmra.mrb[0].mxu0 %v1004
          %v1129 = vpop.f32.mrb[0].mxu0
          %v1130 = vadd.f32 %v1036, %v1129
          %v1131 = vpop.f32.mrb[0].mxu0
          %1132 = vmatprep.mubr.f32.mxu0 0.0
          %1133 = vmatmul.mubr.f32.gmra.mrb[0].mxu0 %v1005
          %v1134 = vpop.f32.mrb[0].mxu0
          %v1135 = vadd.f32 %v1036, %v1134
          %v1136 = vpop.f32.mrb[0].mxu0
          %1137 = vmatprep.mubr.f32.mxu0 0.0
          %1138 = vmatmul.mubr.f32.gmra.mrb[0].mxu0 %v1006
          %v1139 = vpop.f32.mrb[0].mxu0
          %v1140 = vadd.f32 %v1036, %v1139
          %v1141 = vpop.f32.mrb[0].mxu0
          %1142 = vmatprep.mubr.f32.mxu0 0.0
          %1143 = vmatmul.mubr.f32.gmra.mrb[0].mxu0 %v1007
          %v1144 = vpop.f32.mrb[0].mxu0
          %v1145 = vadd.f32 %v1036, %v1144
          %v1146 = vpop.f32.mrb[0].mxu0
          %1147 = vmatprep.mubr.f32.mxu0 0.0
          %1148 = vmatmul.mubr.f32.gmra.mrb[0].mxu0 %v1008
          %v1149 = vpop.f32.mrb[0].mxu0
          %v1150 = vadd.f32 %v1036, %v1149
          %v1151 = vpop.f32.mrb[0].mxu0
          %1152 = vmatprep.mubr.f32.mxu0 0.0
          %1153 = vmatmul.mubr.f32.gmra.mrb[0].mxu0 %v1009
          %v1154 = vpop.f32.mrb[0].mxu0
          %v1155 = vadd.f32 %v1036, %v1154
          %v1156 = vpop.f32.mrb[0].mxu0
          %1157 = vmatprep.mubr.f32.mxu0 0.0
          %1158 = vmatmul.mubr.f32.gmra.mrb[0].mxu0 %v1010
          %v1159 = vpop.f32.mrb[0].mxu0
          %v1160 = vadd.f32 %v1036, %v1159
          %v1161 = vpop.f32.mrb[0].mxu0
          %1162 = vmatprep.mubr.f32.mxu0 0.0
          %1163 = vmatmul.mubr.f32.gmra.mrb[0].mxu0 %v1011
          %v1164 = vpop.f32.mrb[0].mxu0
          %v1165 = vadd.f32 %v1036, %v1164
          %v1166 = vpop.f32.mrb[0].mxu0
          %1167 = vmatprep.mubr.f32.mxu0 0.0
          %1168 = vmatmul.mubr.f32.gmra.mrb[0].mxu0 %v1012
          %v1169 = vpop.f32.mrb[0].mxu0
          %v1170 = vadd.f32 %v1036, %v1169
          %v1171 = vpop.f32.mrb[0].mxu0
          %1172 = vmatprep.mubr.f32.mxu0 0.0
          %1173 = vmatmul.mubr.f32.gmra.mrb[0].mxu0 %v1013
          %v1174 = vpop.f32.mrb[0].mxu0
          %v1175 = vadd.f32 %v1036, %v1174
          %v1176 = vpop.f32.mrb[0].mxu0
          %1177 = vmatprep.mubr.f32.mxu0 0.0
          %1178 = vmatmul.mubr.f32.gmra.mrb[0].mxu0 %v1014
          %v1179 = vpop.f32.mrb[0].mxu0
          %v1180 = vadd.f32 %v1036, %v1179
          %v1181 = vpop.f32.mrb[0].mxu0
          %1182 = vdwg.mxu0
          %vm1183 = vcmp.ge.f32.partialorder %v1105, 0.0
          %vm1184 = vcmp.ge.f32.partialorder %v1110, 0.0
          %vm1185 = vcmp.ge.f32.partialorder %v1115, 0.0
          %vm1186 = vcmp.ge.f32.partialorder %v1120, 0.0
          %vm1187 = vcmp.ge.f32.partialorder %v1125, 0.0
          %vm1188 = vcmp.ge.f32.partialorder %v1130, 0.0
          %vm1189 = vcmp.ge.f32.partialorder %v1135, 0.0
          %vm1190 = vcmp.ge.f32.partialorder %v1140, 0.0
          %vm1191 = vcmp.ge.f32.partialorder %v1145, 0.0
          %vm1192 = vcmp.ge.f32.partialorder %v1150, 0.0
          %vm1193 = vcmp.ge.f32.partialorder %v1155, 0.0
          %vm1194 = vcmp.ge.f32.partialorder %v1160, 0.0
          %vm1195 = vcmp.ge.f32.partialorder %v1165, 0.0
          %vm1196 = vcmp.ge.f32.partialorder %v1170, 0.0
          %vm1197 = vcmp.ge.f32.partialorder %v1175, 0.0
          %vm1198 = vcmp.ge.f32.partialorder %v1180, 0.0
          %v1199 = vmul.f32 %v1105, 0.01
          %v1200 = vmul.f32 %v1110, 0.01
          %v1201 = vmul.f32 %v1115, 0.01
          %v1202 = vmul.f32 %v1120, 0.01
          %v1203 = vmul.f32 %v1125, 0.01
          %v1204 = vmul.f32 %v1130, 0.01
          %v1205 = vmul.f32 %v1135, 0.01
          %v1206 = vmul.f32 %v1140, 0.01
          %v1207 = vmul.f32 %v1145, 0.01
          %v1208 = vmul.f32 %v1150, 0.01
          %v1209 = vmul.f32 %v1155, 0.01
          %v1210 = vmul.f32 %v1160, 0.01
          %v1211 = vmul.f32 %v1165, 0.01
          %v1212 = vmul.f32 %v1170, 0.01
          %v1213 = vmul.f32 %v1175, 0.01
          %v1214 = vmul.f32 %v1180, 0.01
          %v1215 = vsel %vm1183, %v1105, %v1199
          %v1216 = vsel %vm1184, %v1110, %v1200
          %v1217 = vsel %vm1185, %v1115, %v1201
          %v1218 = vsel %vm1186, %v1120, %v1202
          %v1219 = vsel %vm1187, %v1125, %v1203
          %v1220 = vsel %vm1188, %v1130, %v1204
          %v1221 = vsel %vm1189, %v1135, %v1205
          %v1222 = vsel %vm1190, %v1140, %v1206
          %v1223 = vsel %vm1191, %v1145, %v1207
          %v1224 = vsel %vm1192, %v1150, %v1208
          %v1225 = vsel %vm1193, %v1155, %v1209
          %v1226 = vsel %vm1194, %v1160, %v1210
          %v1227 = vsel %vm1195, %v1165, %v1211
          %v1228 = vsel %vm1196, %v1170, %v1212
          %v1229 = vsel %vm1197, %v1175, %v1213
          %v1230 = vsel %vm1198, %v1180, %v1214
          %v1231 = vadd.f32 %v1215, %v983
          %v1232 = vadd.f32 %v1216, %v984
          %v1233 = vadd.f32 %v1217, %v985
          %v1234 = vadd.f32 %v1218, %v986
          %v1235 = vadd.f32 %v1219, %v987
          %v1236 = vadd.f32 %v1220, %v988
          %v1237 = vadd.f32 %v1221, %v989
          %v1238 = vadd.f32 %v1222, %v990
          %v1239 = vadd.f32 %v1223, %v991
          %v1240 = vadd.f32 %v1224, %v992
          %v1241 = vadd.f32 %v1225, %v993
          %v1242 = vadd.f32 %v1226, %v994
          %v1243 = vadd.f32 %v1227, %v995
          %v1244 = vadd.f32 %v1228, %v996
          %v1245 = vadd.f32 %v1229, %v997
          %v1246 = vadd.f32 %v1230, %v998
          %1247 = vst [vmem:[%s479] sm:$0xff] %v1231
          %1248 = vst [vmem:[%s479 + $0x8] sm:$0xff] %v1232
          %1249 = vst [vmem:[%s479 + $0x10] sm:$0xff] %v1233
          %1250 = vst [vmem:[%s479 + $0x18] sm:$0xff] %v1234
          %1251 = vst [vmem:[%s479 + $0x20] sm:$0xff] %v1235
          %1252 = vst [vmem:[%s479 + $0x28] sm:$0xff] %v1236
          %1253 = vst [vmem:[%s479 + $0x30] sm:$0xff] %v1237
          %1254 = vst [vmem:[%s479 + $0x38] sm:$0xff] %v1238
          %1255 = vst [vmem:[%s479 + $0x40] sm:$0xff] %v1239
          %1256 = vst [vmem:[%s479 + $0x48] sm:$0xff] %v1240
          %1257 = vst [vmem:[%s479 + $0x50] sm:$0xff] %v1241
          %1258 = vst [vmem:[%s479 + $0x58] sm:$0xff] %v1242
          %1259 = vst [vmem:[%s479 + $0x60] sm:$0xff] %v1243
          %1260 = vst [vmem:[%s479 + $0x68] sm:$0xff] %v1244
          %1261 = vst [vmem:[%s479 + $0x70] sm:$0xff] %v1245
          %1262 = vst [vmem:[%s479 + $0x78] sm:$0xff] %v1246
        $region98: #{bi_aggregator.1} parent=81 // pred_fallthru
          _
        %s1263 = smul.u32 16, %s34
        %p1264 = scmp.lt.s32.totalorder %s1263, 63
        %s1265 = scalar_select %p1264, %s1263, 63
        %s1266 = smul.addr %s1265, 8
        %s1267 = scalar_lea.vmem %s9, %s1266
        // Predicated region
        $region99: #{bi_aggregator.1} parent=81 // pred_check
          %p1268 = pneg %p236
        $region100: #{bi_aggregator.1} parent=81 // pred_check_branch
          %1270 = sbr.rel (%p1268) target = $region102
        $region101: #{bi_aggregator.1} parent=81 // pred_region
          %s1271 = smul.u32 16, %s34
        $region102: #{bi_aggregator.1} parent=81 // pred_fallthru
          _
      $region82: #{bi_aggregator.1} parent=5 // pred_fallthru
        _
      %p1272 = scmp.le.s32.totalorder 2, %s25
      // Predicated region
      $region103: #{bi_aggregator.1} parent=5 // pred_check
        %p1273 = pneg %p1272
      $region104: #{bi_aggregator.1} parent=5 // pred_check_branch
        %1275 = sbr.rel (%p1273) target = $region106
      $region105: #{bi_aggregator.1} parent=5 // pred_region
        %s1276 = ssub.s32 %s25, 2
        // Predicated region
        $region107: #{bi_aggregator.1} parent=105 // pred_check
          %p1277 = pneg %p242
        $region108: #{bi_aggregator.1} parent=105 // pred_check_branch
          %1279 = sbr.rel (%p1277) target = $region110
        $region109: #{bi_aggregator.1} parent=105 // pred_region
          %s1280 = smul.u32 16, %s36
          %p1281 = scmp.lt.s32.totalorder %s1280, 63
          %s1282 = scalar_select %p1281, %s1280, 63
          %s1283 = smul.addr %s1282, 8
          %s1284 = scalar_lea.vmem %s9, %s1283
        $region110: #{bi_aggregator.1} parent=105 // pred_fallthru
          _
      $region106: #{bi_aggregator.1} parent=5 // pred_fallthru
        _
    $region6: #{bi_aggregator.1} parent=1 // loop_footer
      %s29 = sadd.s32 1, %s25
    $region7: #{bi_aggregator.1} parent=1 // loop_footer_branch
      %24 = sbr.rel target = $region3
    $region8: #{bi_aggregator.1} parent=1 // loop_exit
      _

</llo_original>
